<compile_context>
chip_gen: v5e
topology: v5e:2x2
jax: 0.10.0
libtpu: 0.0.40
codegen_flags: <defaults>
</compile_context>

<pallas_src>
import functools

import jax
import jax.numpy as jnp
from jax.experimental import pallas as pl
from jax.experimental.pallas import tpu as pltpu


def _lstm_kernel(x_ref,       # (S*Bp, D)   time-major flattened input
                 w0x_ref,     # (D, 4H)     layer-0 x-weights, gate cols [i,f,o,g]
                 w0h_ref,     # (H, 4H)     layer-0 h-weights
                 b0_ref,      # (1, 4H)     layer-0 bias (b_ih + b_hh)
                 w1x_ref,     # (H, 4H)     layer-1 x-weights (input = h0)
                 w1h_ref,     # (H, 4H)     layer-1 h-weights
                 b1_ref,      # (1, 4H)     layer-1 bias
                 wl_ref,      # (1, H) if O==1 else (H, O)
                 bl_ref,      # (1, O)
                 out_ref,     # (Bp, O)
                 xp_ref,      # VMEM scratch (S*Bp, 4H): hoisted layer-0 x-projection
                 *, seq_len, batch_pad, reduce_linear):
    S, Bp = seq_len, batch_pad
    H = w0h_ref.shape[0]

    # ---- Preamble: layer-0 input projection for ALL timesteps in one MXU call,
    # bias folded in once.  This work has no recurrent dependency.
    xp_ref[...] = (jnp.dot(x_ref[...], w0x_ref[...],
                           preferred_element_type=jnp.float32) + b0_ref[...])

    # Hoist layer-1 bias broadcast out of the time loop (JAX does not CSE it).
    b1 = jnp.broadcast_to(b1_ref[...], (Bp, 4 * H))

    def act(z, c_prev):
        # Fused gate block, column order [i, f, o, g]:
        # one sigmoid over lanes 0:3H, one tanh over lanes 3H:4H.
        s = jax.nn.sigmoid(z[:, :3 * H])
        g = jnp.tanh(z[:, 3 * H:])
        i = s[:, :H]
        f = s[:, H:2 * H]
        o = s[:, 2 * H:]
        c_new = f * c_prev + i * g
        h_new = o * jnp.tanh(c_new)
        return h_new, c_new

    def step(t, carry):
        h0, c0, h1, c1 = carry
        row = pl.multiple_of(t * Bp, Bp)                       # sublane-aligned
        # Layer 0: precomputed x-projection + single (Bp,H)x(H,4H) h-matmul.
        z0 = xp_ref[pl.ds(row, Bp), :] + jnp.dot(
            h0, w0h_ref[...], preferred_element_type=jnp.float32)
        h0, c0 = act(z0, c0)
        # Layer 1: two lane-dense (Bp,H)x(H,4H) matmuls, one bias add.
        z1 = (jnp.dot(h0, w1x_ref[...], preferred_element_type=jnp.float32)
              + jnp.dot(h1, w1h_ref[...], preferred_element_type=jnp.float32)
              + b1)
        h1, c1 = act(z1, c1)
        return h0, c0, h1, c1

    zeros = jnp.zeros((Bp, H), jnp.float32)
    # Serial recurrence: fully unrolled, carry lives in vregs.
    h0, c0, h1, c1 = jax.lax.fori_loop(0, S, step, (zeros,) * 4, unroll=True)

    # ---- Final Linear on the last timestep's top-layer hidden state.
    if reduce_linear:
        # O == 1: broadcast-mul + lane reduce instead of a 1-wide MXU matmul.
        out_ref[...] = (jnp.sum(h1 * wl_ref[...], axis=-1, keepdims=True)
                        + bl_ref[...])
    else:
        out_ref[...] = (jnp.dot(h1, wl_ref[...],
                                preferred_element_type=jnp.float32)
                        + bl_ref[...])


def lstm_forward(x, packed):
    """x: (seq, batch, input_dim) f32.  Returns (batch * output_dim,)."""
    S, B, D = x.shape
    H = packed["w0h"].shape[0]
    O = packed["b_lin"].shape[-1]
    Bp = max(8, ((B + 7) // 8) * 8)          # pad batch to full sublane width
    x_pad = jnp.pad(x, ((0, 0), (0, Bp - B), (0, 0))).reshape(S * Bp, D)

    vmem = pl.BlockSpec(memory_space=pltpu.MemorySpace.VMEM)  # resident, no grid
    kernel = functools.partial(_lstm_kernel, seq_len=S, batch_pad=Bp,
                               reduce_linear=(O == 1))
    out = pl.pallas_call(
        kernel,
        out_shape=jax.ShapeDtypeStruct((Bp, O), jnp.float32),
        in_specs=[vmem] * 9,
        out_specs=vmem,
        scratch_shapes=[pltpu.VMEM((S * Bp, 4 * H), jnp.float32)],
    )(x_pad, packed["w0x"], packed["w0h"], packed["b0"],
      packed["w1x"], packed["w1h"], packed["b1"],
      packed["w_lin"], packed["b_lin"])

    return out[:B].reshape(-1)               # matches y_pred.view(-1)


lstm_forward = jax.jit(lstm_forward)


# ----------------------------------------------------------------------------
# Parameter construction (PyTorch shapes) + packing into the kernel layout.
# ----------------------------------------------------------------------------
def init_torch_params(key, input_dim, hidden_dim, output_dim):
    """PyTorch-shaped params: weight_ih_l* (4H, D_in), weight_hh_l* (4H, H),
    bias_ih_l*/bias_hh_l* (4H,), linear weight (O, H), bias (O,)."""
    D, H, O = input_dim, hidden_dim, output_dim
    ks = jax.random.split(key, 10)
    s = 1.0 / jnp.sqrt(H)
    u = lambda k, shape: jax.random.uniform(k, shape, jnp.float32, -s, s)
    return {
        "w_ih_l0": u(ks[0], (4 * H, D)), "w_hh_l0": u(ks[1], (4 * H, H)),
        "b_ih_l0": u(ks[2], (4 * H,)),   "b_hh_l0": u(ks[3], (4 * H,)),
        "w_ih_l1": u(ks[4], (4 * H, H)), "w_hh_l1": u(ks[5], (4 * H, H)),
        "b_ih_l1": u(ks[6], (4 * H,)),   "b_hh_l1": u(ks[7], (4 * H,)),
        "w_lin":   u(ks[8], (O, H)),     "b_lin":   u(ks[9], (O,)),
    }


def pack_params(p):
    """Pack weights as lane-dense (K, 4H) slabs with gate columns reordered
    from PyTorch [i, f, g, o] to [i, f, o, g]; biases summed into (1, 4H).
    NOTE: the in-kernel lane slices assume this [i, f, o, g] ordering."""
    H = p["w_hh_l0"].shape[1]
    O = p["w_lin"].shape[0]
    order = jnp.array([0, 1, 3, 2])          # [i, f, g, o] -> [i, f, o, g]

    def slab(w):                             # (4H, K) -> (K, 4H), reordered
        K = w.shape[1]
        wt = w.T.reshape(K, 4, H)
        return jnp.take(wt, order, axis=1).reshape(K, 4 * H)

    def bias(b_ih, b_hh):
        b = (b_ih + b_hh).reshape(4, H)
        return jnp.take(b, order, axis=0).reshape(1, 4 * H)

    packed = {
        "w0x": slab(p["w_ih_l0"]), "w0h": slab(p["w_hh_l0"]),
        "b0": bias(p["b_ih_l0"], p["b_hh_l0"]),
        "w1x": slab(p["w_ih_l1"]), "w1h": slab(p["w_hh_l1"]),
        "b1": bias(p["b_ih_l1"], p["b_hh_l1"]),
    }
    if O == 1:
        packed["w_lin"] = p["w_lin"]                 # (1, H), broadcast-mul path
        packed["b_lin"] = p["b_lin"].reshape(1, 1)
    else:
        packed["w_lin"] = p["w_lin"].T               # (H, O), matmul path
        packed["b_lin"] = p["b_lin"].reshape(1, O)
    return packed


# ----------------------------------------------------------------------------
# Pure-JAX reference (mirrors PyTorch nn.LSTM math) for a numerical self-check.
# ----------------------------------------------------------------------------
def lstm_reference(x, p):
    S, B, _ = x.shape
    H = p["w_hh_l0"].shape[1]

    def cell(xt, h, c, w_ih, w_hh, b_ih, b_hh):
        gates = xt @ w_ih.T + h @ w_hh.T + b_ih + b_hh
        i, f, g, o = jnp.split(gates, 4, axis=-1)
        i, f, o = jax.nn.sigmoid(i), jax.nn.sigmoid(f), jax.nn.sigmoid(o)
        g = jnp.tanh(g)
        c = f * c + i * g
        h = o * jnp.tanh(c)
        return h, c

    z = jnp.zeros((B, H), jnp.float32)
    h0 = c0 = h1 = c1 = z
    for t in range(S):
        h0, c0 = cell(x[t], h0, c0, p["w_ih_l0"], p["w_hh_l0"],
                      p["b_ih_l0"], p["b_hh_l0"])
        h1, c1 = cell(h0, h1, c1, p["w_ih_l1"], p["w_hh_l1"],
                      p["b_ih_l1"], p["b_hh_l1"])
    return (h1 @ p["w_lin"].T + p["b_lin"]).reshape(-1)


if __name__ == "__main__":
    # Small shapes consistent with the module: seq=8, batch=2, input_dim=4,
    # hidden_dim=32, output_dim=1, num_layers=2, dropout=0.0.
    seq, batch, input_dim, hidden_dim, output_dim = 8, 2, 4, 32, 1

    key = jax.random.PRNGKey(0)
    k_x, k_p = jax.random.split(key)
    x = jax.random.normal(k_x, (seq, batch, input_dim), jnp.float32)

    torch_params = init_torch_params(k_p, input_dim, hidden_dim, output_dim)
    packed = pack_params(torch_params)

    y = lstm_forward(x, packed)
    jax.block_until_ready(y)
    assert y.shape == (batch * output_dim,)

    y_ref = lstm_reference(x, torch_params)
    assert jnp.allclose(y, y_ref, rtol=2e-3, atol=2e-3)

    print("KERNEL_OK")
</pallas_src>

<mosaic_0001>
module attributes {stable_mosaic.version = 11 : i64} {
  func.func @_lstm_kernel(%arg0: memref<64x4xf32, #tpu.memory_space<vmem>>, %arg1: memref<4x128xf32, #tpu.memory_space<vmem>>, %arg2: memref<32x128xf32, #tpu.memory_space<vmem>>, %arg3: memref<1x128xf32, #tpu.memory_space<vmem>>, %arg4: memref<32x128xf32, #tpu.memory_space<vmem>>, %arg5: memref<32x128xf32, #tpu.memory_space<vmem>>, %arg6: memref<1x128xf32, #tpu.memory_space<vmem>>, %arg7: memref<1x32xf32, #tpu.memory_space<vmem>>, %arg8: memref<1x1xf32, #tpu.memory_space<vmem>>, %arg9: memref<8x1xf32, #tpu.memory_space<vmem>>, %arg10: memref<64x128xf32, #tpu.memory_space<vmem>>) attributes {dimension_semantics = [], scalar_prefetch = 0 : i64, scratch_operands = 1 : i64, tpu.core_type = #tpu.core_type<tc>} {
    %c0 = arith.constant 0 : index
    %c0_0 = arith.constant 0 : index
    %0 = vector.load %arg0[%c0, %c0_0] : memref<64x4xf32, #tpu.memory_space<vmem>>, vector<64x4xf32>
    %c0_1 = arith.constant 0 : index
    %c0_2 = arith.constant 0 : index
    %1 = vector.load %arg1[%c0_1, %c0_2] : memref<4x128xf32, #tpu.memory_space<vmem>>, vector<4x128xf32>
    %cst = arith.constant dense<0.000000e+00> : vector<64x128xf32>
    %2 = tpu.matmul %0, %1, %cst {dimension_numbers = #tpu.dot_dimension_numbers<[1], [0], [0], [1], [0, 0, 1, 1], [], []>} : vector<64x4xf32>, vector<4x128xf32>, vector<64x128xf32> -> vector<64x128xf32>
    %c0_3 = arith.constant 0 : index
    %c0_4 = arith.constant 0 : index
    %3 = vector.load %arg3[%c0_3, %c0_4] : memref<1x128xf32, #tpu.memory_space<vmem>>, vector<1x128xf32>
    %4 = vector.broadcast %3 : vector<1x128xf32> to vector<64x128xf32>
    %5 = arith.addf %2, %4 : vector<64x128xf32>
    %c0_5 = arith.constant 0 : index
    %c0_6 = arith.constant 0 : index
    %6 = vector.load %arg10[%c0_5, %c0_6] : memref<64x128xf32, #tpu.memory_space<vmem>>, vector<64x128xf32>
    tpu.vector_store %arg10[%c0_5, %c0_6], %5 {strides = array<i32>} : memref<64x128xf32, #tpu.memory_space<vmem>>, vector<64x128xf32>,
    %c0_7 = arith.constant 0 : index
    %c0_8 = arith.constant 0 : index
    %7 = vector.load %arg6[%c0_7, %c0_8] : memref<1x128xf32, #tpu.memory_space<vmem>>, vector<1x128xf32>
    %8 = vector.shape_cast %7 : vector<1x128xf32> to vector<1x128xf32>
    %9 = vector.broadcast %8 : vector<1x128xf32> to vector<8x128xf32>
    %cst_9 = arith.constant 0.000000e+00 : f32
    %10 = vector.broadcast %cst_9 : f32 to vector<8x32xf32>
    %c0_i32 = arith.constant 0 : i32
    %c8_i32 = arith.constant 8 : i32
    %11 = arith.muli %c0_i32, %c8_i32 : i32
    %12 = tpu.assume_multiple %11, 8 : i32
    %13 = arith.index_cast %12 : i32 to index
    %c0_10 = arith.constant 0 : index
    %14 = vector.load %arg10[%13, %c0_10] : memref<64x128xf32, #tpu.memory_space<vmem>>, vector<8x128xf32>
    %c0_11 = arith.constant 0 : index
    %c0_12 = arith.constant 0 : index
    %15 = vector.load %arg2[%c0_11, %c0_12] : memref<32x128xf32, #tpu.memory_space<vmem>>, vector<32x128xf32>
    %cst_13 = arith.constant dense<0.000000e+00> : vector<8x128xf32>
    %16 = tpu.matmul %10, %15, %cst_13 {dimension_numbers = #tpu.dot_dimension_numbers<[1], [0], [0], [1], [0, 0, 1, 1], [], []>} : vector<8x32xf32>, vector<32x128xf32>, vector<8x128xf32> -> vector<8x128xf32>
    %17 = arith.addf %14, %16 : vector<8x128xf32>
    %18 = vector.extract_strided_slice %17 {offsets = [0, 0], sizes = [8, 96], strides = [1, 1]} : vector<8x128xf32> to vector<8x96xf32>
    %19 = arith.negf %18 : vector<8x96xf32>
    %20 = math.exp %19 : vector<8x96xf32>
    %cst_14 = arith.constant 1.000000e+00 : f32
    %21 = vector.broadcast %cst_14 : f32 to vector<8x96xf32>
    %22 = arith.addf %21, %20 : vector<8x96xf32>
    %23 = arith.divf %21, %22 : vector<8x96xf32>
    %24 = vector.extract_strided_slice %17 {offsets = [0, 96], sizes = [8, 32], strides = [1, 1]} : vector<8x128xf32> to vector<8x32xf32>
    %25 = math.tanh %24 : vector<8x32xf32>
    %26 = vector.extract_strided_slice %23 {offsets = [0, 0], sizes = [8, 32], strides = [1, 1]} : vector<8x96xf32> to vector<8x32xf32>
    %27 = vector.extract_strided_slice %23 {offsets = [0, 32], sizes = [8, 32], strides = [1, 1]} : vector<8x96xf32> to vector<8x32xf32>
    %28 = vector.extract_strided_slice %23 {offsets = [0, 64], sizes = [8, 32], strides = [1, 1]} : vector<8x96xf32> to vector<8x32xf32>
    %29 = arith.mulf %27, %10 : vector<8x32xf32>
    %30 = arith.mulf %26, %25 : vector<8x32xf32>
    %31 = arith.addf %29, %30 : vector<8x32xf32>
    %32 = math.tanh %31 : vector<8x32xf32>
    %33 = arith.mulf %28, %32 : vector<8x32xf32>
    %c0_15 = arith.constant 0 : index
    %c0_16 = arith.constant 0 : index
    %34 = vector.load %arg4[%c0_15, %c0_16] : memref<32x128xf32, #tpu.memory_space<vmem>>, vector<32x128xf32>
    %cst_17 = arith.constant dense<0.000000e+00> : vector<8x128xf32>
    %35 = tpu.matmul %33, %34, %cst_17 {dimension_numbers = #tpu.dot_dimension_numbers<[1], [0], [0], [1], [0, 0, 1, 1], [], []>} : vector<8x32xf32>, vector<32x128xf32>, vector<8x128xf32> -> vector<8x128xf32>
    %c0_18 = arith.constant 0 : index
    %c0_19 = arith.constant 0 : index
    %36 = vector.load %arg5[%c0_18, %c0_19] : memref<32x128xf32, #tpu.memory_space<vmem>>, vector<32x128xf32>
    %cst_20 = arith.constant dense<0.000000e+00> : vector<8x128xf32>
    %37 = tpu.matmul %10, %36, %cst_20 {dimension_numbers = #tpu.dot_dimension_numbers<[1], [0], [0], [1], [0, 0, 1, 1], [], []>} : vector<8x32xf32>, vector<32x128xf32>, vector<8x128xf32> -> vector<8x128xf32>
    %38 = arith.addf %35, %37 : vector<8x128xf32>
    %39 = arith.addf %38, %9 : vector<8x128xf32>
    %40 = vector.extract_strided_slice %39 {offsets = [0, 0], sizes = [8, 96], strides = [1, 1]} : vector<8x128xf32> to vector<8x96xf32>
    %41 = arith.negf %40 : vector<8x96xf32>
    %42 = math.exp %41 : vector<8x96xf32>
    %cst_21 = arith.constant 1.000000e+00 : f32
    %43 = vector.broadcast %cst_21 : f32 to vector<8x96xf32>
    %44 = arith.addf %43, %42 : vector<8x96xf32>
    %45 = arith.divf %43, %44 : vector<8x96xf32>
    %46 = vector.extract_strided_slice %39 {offsets = [0, 96], sizes = [8, 32], strides = [1, 1]} : vector<8x128xf32> to vector<8x32xf32>
    %47 = math.tanh %46 : vector<8x32xf32>
    %48 = vector.extract_strided_slice %45 {offsets = [0, 0], sizes = [8, 32], strides = [1, 1]} : vector<8x96xf32> to vector<8x32xf32>
    %49 = vector.extract_strided_slice %45 {offsets = [0, 32], sizes = [8, 32], strides = [1, 1]} : vector<8x96xf32> to vector<8x32xf32>
    %50 = vector.extract_strided_slice %45 {offsets = [0, 64], sizes = [8, 32], strides = [1, 1]} : vector<8x96xf32> to vector<8x32xf32>
    %51 = arith.mulf %49, %10 : vector<8x32xf32>
    %52 = arith.mulf %48, %47 : vector<8x32xf32>
    %53 = arith.addf %51, %52 : vector<8x32xf32>
    %54 = math.tanh %53 : vector<8x32xf32>
    %55 = arith.mulf %50, %54 : vector<8x32xf32>
    %c1_i32 = arith.constant 1 : i32
    %c8_i32_22 = arith.constant 8 : i32
    %56 = arith.muli %c1_i32, %c8_i32_22 : i32
    %57 = tpu.assume_multiple %56, 8 : i32
    %58 = arith.index_cast %57 : i32 to index
    %c0_23 = arith.constant 0 : index
    %59 = vector.load %arg10[%58, %c0_23] : memref<64x128xf32, #tpu.memory_space<vmem>>, vector<8x128xf32>
    %c0_24 = arith.constant 0 : index
    %c0_25 = arith.constant 0 : index
    %60 = vector.load %arg2[%c0_24, %c0_25] : memref<32x128xf32, #tpu.memory_space<vmem>>, vector<32x128xf32>
    %cst_26 = arith.constant dense<0.000000e+00> : vector<8x128xf32>
    %61 = tpu.matmul %33, %60, %cst_26 {dimension_numbers = #tpu.dot_dimension_numbers<[1], [0], [0], [1], [0, 0, 1, 1], [], []>} : vector<8x32xf32>, vector<32x128xf32>, vector<8x128xf32> -> vector<8x128xf32>
    %62 = arith.addf %59, %61 : vector<8x128xf32>
    %63 = vector.extract_strided_slice %62 {offsets = [0, 0], sizes = [8, 96], strides = [1, 1]} : vector<8x128xf32> to vector<8x96xf32>
    %64 = arith.negf %63 : vector<8x96xf32>
    %65 = math.exp %64 : vector<8x96xf32>
    %cst_27 = arith.constant 1.000000e+00 : f32
    %66 = vector.broadcast %cst_27 : f32 to vector<8x96xf32>
    %67 = arith.addf %66, %65 : vector<8x96xf32>
    %68 = arith.divf %66, %67 : vector<8x96xf32>
    %69 = vector.extract_strided_slice %62 {offsets = [0, 96], sizes = [8, 32], strides = [1, 1]} : vector<8x128xf32> to vector<8x32xf32>
    %70 = math.tanh %69 : vector<8x32xf32>
    %71 = vector.extract_strided_slice %68 {offsets = [0, 0], sizes = [8, 32], strides = [1, 1]} : vector<8x96xf32> to vector<8x32xf32>
    %72 = vector.extract_strided_slice %68 {offsets = [0, 32], sizes = [8, 32], strides = [1, 1]} : vector<8x96xf32> to vector<8x32xf32>
    %73 = vector.extract_strided_slice %68 {offsets = [0, 64], sizes = [8, 32], strides = [1, 1]} : vector<8x96xf32> to vector<8x32xf32>
    %74 = arith.mulf %72, %31 : vector<8x32xf32>
    %75 = arith.mulf %71, %70 : vector<8x32xf32>
    %76 = arith.addf %74, %75 : vector<8x32xf32>
    %77 = math.tanh %76 : vector<8x32xf32>
    %78 = arith.mulf %73, %77 : vector<8x32xf32>
    %c0_28 = arith.constant 0 : index
    %c0_29 = arith.constant 0 : index
    %79 = vector.load %arg4[%c0_28, %c0_29] : memref<32x128xf32, #tpu.memory_space<vmem>>, vector<32x128xf32>
    %cst_30 = arith.constant dense<0.000000e+00> : vector<8x128xf32>
    %80 = tpu.matmul %78, %79, %cst_30 {dimension_numbers = #tpu.dot_dimension_numbers<[1], [0], [0], [1], [0, 0, 1, 1], [], []>} : vector<8x32xf32>, vector<32x128xf32>, vector<8x128xf32> -> vector<8x128xf32>
    %c0_31 = arith.constant 0 : index
    %c0_32 = arith.constant 0 : index
    %81 = vector.load %arg5[%c0_31, %c0_32] : memref<32x128xf32, #tpu.memory_space<vmem>>, vector<32x128xf32>
    %cst_33 = arith.constant dense<0.000000e+00> : vector<8x128xf32>
    %82 = tpu.matmul %55, %81, %cst_33 {dimension_numbers = #tpu.dot_dimension_numbers<[1], [0], [0], [1], [0, 0, 1, 1], [], []>} : vector<8x32xf32>, vector<32x128xf32>, vector<8x128xf32> -> vector<8x128xf32>
    %83 = arith.addf %80, %82 : vector<8x128xf32>
    %84 = arith.addf %83, %9 : vector<8x128xf32>
    %85 = vector.extract_strided_slice %84 {offsets = [0, 0], sizes = [8, 96], strides = [1, 1]} : vector<8x128xf32> to vector<8x96xf32>
    %86 = arith.negf %85 : vector<8x96xf32>
    %87 = math.exp %86 : vector<8x96xf32>
    %cst_34 = arith.constant 1.000000e+00 : f32
    %88 = vector.broadcast %cst_34 : f32 to vector<8x96xf32>
    %89 = arith.addf %88, %87 : vector<8x96xf32>
    %90 = arith.divf %88, %89 : vector<8x96xf32>
    %91 = vector.extract_strided_slice %84 {offsets = [0, 96], sizes = [8, 32], strides = [1, 1]} : vector<8x128xf32> to vector<8x32xf32>
    %92 = math.tanh %91 : vector<8x32xf32>
    %93 = vector.extract_strided_slice %90 {offsets = [0, 0], sizes = [8, 32], strides = [1, 1]} : vector<8x96xf32> to vector<8x32xf32>
    %94 = vector.extract_strided_slice %90 {offsets = [0, 32], sizes = [8, 32], strides = [1, 1]} : vector<8x96xf32> to vector<8x32xf32>
    %95 = vector.extract_strided_slice %90 {offsets = [0, 64], sizes = [8, 32], strides = [1, 1]} : vector<8x96xf32> to vector<8x32xf32>
    %96 = arith.mulf %94, %53 : vector<8x32xf32>
    %97 = arith.mulf %93, %92 : vector<8x32xf32>
    %98 = arith.addf %96, %97 : vector<8x32xf32>
    %99 = math.tanh %98 : vector<8x32xf32>
    %100 = arith.mulf %95, %99 : vector<8x32xf32>
    %c2_i32 = arith.constant 2 : i32
    %c8_i32_35 = arith.constant 8 : i32
    %101 = arith.muli %c2_i32, %c8_i32_35 : i32
    %102 = tpu.assume_multiple %101, 8 : i32
    %103 = arith.index_cast %102 : i32 to index
    %c0_36 = arith.constant 0 : index
    %104 = vector.load %arg10[%103, %c0_36] : memref<64x128xf32, #tpu.memory_space<vmem>>, vector<8x128xf32>
    %c0_37 = arith.constant 0 : index
    %c0_38 = arith.constant 0 : index
    %105 = vector.load %arg2[%c0_37, %c0_38] : memref<32x128xf32, #tpu.memory_space<vmem>>, vector<32x128xf32>
    %cst_39 = arith.constant dense<0.000000e+00> : vector<8x128xf32>
    %106 = tpu.matmul %78, %105, %cst_39 {dimension_numbers = #tpu.dot_dimension_numbers<[1], [0], [0], [1], [0, 0, 1, 1], [], []>} : vector<8x32xf32>, vector<32x128xf32>, vector<8x128xf32> -> vector<8x128xf32>
    %107 = arith.addf %104, %106 : vector<8x128xf32>
    %108 = vector.extract_strided_slice %107 {offsets = [0, 0], sizes = [8, 96], strides = [1, 1]} : vector<8x128xf32> to vector<8x96xf32>
    %109 = arith.negf %108 : vector<8x96xf32>
    %110 = math.exp %109 : vector<8x96xf32>
    %cst_40 = arith.constant 1.000000e+00 : f32
    %111 = vector.broadcast %cst_40 : f32 to vector<8x96xf32>
    %112 = arith.addf %111, %110 : vector<8x96xf32>
    %113 = arith.divf %111, %112 : vector<8x96xf32>
    %114 = vector.extract_strided_slice %107 {offsets = [0, 96], sizes = [8, 32], strides = [1, 1]} : vector<8x128xf32> to vector<8x32xf32>
    %115 = math.tanh %114 : vector<8x32xf32>
    %116 = vector.extract_strided_slice %113 {offsets = [0, 0], sizes = [8, 32], strides = [1, 1]} : vector<8x96xf32> to vector<8x32xf32>
    %117 = vector.extract_strided_slice %113 {offsets = [0, 32], sizes = [8, 32], strides = [1, 1]} : vector<8x96xf32> to vector<8x32xf32>
    %118 = vector.extract_strided_slice %113 {offsets = [0, 64], sizes = [8, 32], strides = [1, 1]} : vector<8x96xf32> to vector<8x32xf32>
    %119 = arith.mulf %117, %76 : vector<8x32xf32>
    %120 = arith.mulf %116, %115 : vector<8x32xf32>
    %121 = arith.addf %119, %120 : vector<8x32xf32>
    %122 = math.tanh %121 : vector<8x32xf32>
    %123 = arith.mulf %118, %122 : vector<8x32xf32>
    %c0_41 = arith.constant 0 : index
    %c0_42 = arith.constant 0 : index
    %124 = vector.load %arg4[%c0_41, %c0_42] : memref<32x128xf32, #tpu.memory_space<vmem>>, vector<32x128xf32>
    %cst_43 = arith.constant dense<0.000000e+00> : vector<8x128xf32>
    %125 = tpu.matmul %123, %124, %cst_43 {dimension_numbers = #tpu.dot_dimension_numbers<[1], [0], [0], [1], [0, 0, 1, 1], [], []>} : vector<8x32xf32>, vector<32x128xf32>, vector<8x128xf32> -> vector<8x128xf32>
    %c0_44 = arith.constant 0 : index
    %c0_45 = arith.constant 0 : index
    %126 = vector.load %arg5[%c0_44, %c0_45] : memref<32x128xf32, #tpu.memory_space<vmem>>, vector<32x128xf32>
    %cst_46 = arith.constant dense<0.000000e+00> : vector<8x128xf32>
    %127 = tpu.matmul %100, %126, %cst_46 {dimension_numbers = #tpu.dot_dimension_numbers<[1], [0], [0], [1], [0, 0, 1, 1], [], []>} : vector<8x32xf32>, vector<32x128xf32>, vector<8x128xf32> -> vector<8x128xf32>
    %128 = arith.addf %125, %127 : vector<8x128xf32>
    %129 = arith.addf %128, %9 : vector<8x128xf32>
    %130 = vector.extract_strided_slice %129 {offsets = [0, 0], sizes = [8, 96], strides = [1, 1]} : vector<8x128xf32> to vector<8x96xf32>
    %131 = arith.negf %130 : vector<8x96xf32>
    %132 = math.exp %131 : vector<8x96xf32>
    %cst_47 = arith.constant 1.000000e+00 : f32
    %133 = vector.broadcast %cst_47 : f32 to vector<8x96xf32>
    %134 = arith.addf %133, %132 : vector<8x96xf32>
    %135 = arith.divf %133, %134 : vector<8x96xf32>
    %136 = vector.extract_strided_slice %129 {offsets = [0, 96], sizes = [8, 32], strides = [1, 1]} : vector<8x128xf32> to vector<8x32xf32>
    %137 = math.tanh %136 : vector<8x32xf32>
    %138 = vector.extract_strided_slice %135 {offsets = [0, 0], sizes = [8, 32], strides = [1, 1]} : vector<8x96xf32> to vector<8x32xf32>
    %139 = vector.extract_strided_slice %135 {offsets = [0, 32], sizes = [8, 32], strides = [1, 1]} : vector<8x96xf32> to vector<8x32xf32>
    %140 = vector.extract_strided_slice %135 {offsets = [0, 64], sizes = [8, 32], strides = [1, 1]} : vector<8x96xf32> to vector<8x32xf32>
    %141 = arith.mulf %139, %98 : vector<8x32xf32>
    %142 = arith.mulf %138, %137 : vector<8x32xf32>
    %143 = arith.addf %141, %142 : vector<8x32xf32>
    %144 = math.tanh %143 : vector<8x32xf32>
    %145 = arith.mulf %140, %144 : vector<8x32xf32>
    %c3_i32 = arith.constant 3 : i32
    %c8_i32_48 = arith.constant 8 : i32
    %146 = arith.muli %c3_i32, %c8_i32_48 : i32
    %147 = tpu.assume_multiple %146, 8 : i32
    %148 = arith.index_cast %147 : i32 to index
    %c0_49 = arith.constant 0 : index
    %149 = vector.load %arg10[%148, %c0_49] : memref<64x128xf32, #tpu.memory_space<vmem>>, vector<8x128xf32>
    %c0_50 = arith.constant 0 : index
    %c0_51 = arith.constant 0 : index
    %150 = vector.load %arg2[%c0_50, %c0_51] : memref<32x128xf32, #tpu.memory_space<vmem>>, vector<32x128xf32>
    %cst_52 = arith.constant dense<0.000000e+00> : vector<8x128xf32>
    %151 = tpu.matmul %123, %150, %cst_52 {dimension_numbers = #tpu.dot_dimension_numbers<[1], [0], [0], [1], [0, 0, 1, 1], [], []>} : vector<8x32xf32>, vector<32x128xf32>, vector<8x128xf32> -> vector<8x128xf32>
    %152 = arith.addf %149, %151 : vector<8x128xf32>
    %153 = vector.extract_strided_slice %152 {offsets = [0, 0], sizes = [8, 96], strides = [1, 1]} : vector<8x128xf32> to vector<8x96xf32>
    %154 = arith.negf %153 : vector<8x96xf32>
    %155 = math.exp %154 : vector<8x96xf32>
    %cst_53 = arith.constant 1.000000e+00 : f32
    %156 = vector.broadcast %cst_53 : f32 to vector<8x96xf32>
    %157 = arith.addf %156, %155 : vector<8x96xf32>
    %158 = arith.divf %156, %157 : vector<8x96xf32>
    %159 = vector.extract_strided_slice %152 {offsets = [0, 96], sizes = [8, 32], strides = [1, 1]} : vector<8x128xf32> to vector<8x32xf32>
    %160 = math.tanh %159 : vector<8x32xf32>
    %161 = vector.extract_strided_slice %158 {offsets = [0, 0], sizes = [8, 32], strides = [1, 1]} : vector<8x96xf32> to vector<8x32xf32>
    %162 = vector.extract_strided_slice %158 {offsets = [0, 32], sizes = [8, 32], strides = [1, 1]} : vector<8x96xf32> to vector<8x32xf32>
    %163 = vector.extract_strided_slice %158 {offsets = [0, 64], sizes = [8, 32], strides = [1, 1]} : vector<8x96xf32> to vector<8x32xf32>
    %164 = arith.mulf %162, %121 : vector<8x32xf32>
    %165 = arith.mulf %161, %160 : vector<8x32xf32>
    %166 = arith.addf %164, %165 : vector<8x32xf32>
    %167 = math.tanh %166 : vector<8x32xf32>
    %168 = arith.mulf %163, %167 : vector<8x32xf32>
    %c0_54 = arith.constant 0 : index
    %c0_55 = arith.constant 0 : index
    %169 = vector.load %arg4[%c0_54, %c0_55] : memref<32x128xf32, #tpu.memory_space<vmem>>, vector<32x128xf32>
    %cst_56 = arith.constant dense<0.000000e+00> : vector<8x128xf32>
    %170 = tpu.matmul %168, %169, %cst_56 {dimension_numbers = #tpu.dot_dimension_numbers<[1], [0], [0], [1], [0, 0, 1, 1], [], []>} : vector<8x32xf32>, vector<32x128xf32>, vector<8x128xf32> -> vector<8x128xf32>
    %c0_57 = arith.constant 0 : index
    %c0_58 = arith.constant 0 : index
    %171 = vector.load %arg5[%c0_57, %c0_58] : memref<32x128xf32, #tpu.memory_space<vmem>>, vector<32x128xf32>
    %cst_59 = arith.constant dense<0.000000e+00> : vector<8x128xf32>
    %172 = tpu.matmul %145, %171, %cst_59 {dimension_numbers = #tpu.dot_dimension_numbers<[1], [0], [0], [1], [0, 0, 1, 1], [], []>} : vector<8x32xf32>, vector<32x128xf32>, vector<8x128xf32> -> vector<8x128xf32>
    %173 = arith.addf %170, %172 : vector<8x128xf32>
    %174 = arith.addf %173, %9 : vector<8x128xf32>
    %175 = vector.extract_strided_slice %174 {offsets = [0, 0], sizes = [8, 96], strides = [1, 1]} : vector<8x128xf32> to vector<8x96xf32>
    %176 = arith.negf %175 : vector<8x96xf32>
    %177 = math.exp %176 : vector<8x96xf32>
    %cst_60 = arith.constant 1.000000e+00 : f32
    %178 = vector.broadcast %cst_60 : f32 to vector<8x96xf32>
    %179 = arith.addf %178, %177 : vector<8x96xf32>
    %180 = arith.divf %178, %179 : vector<8x96xf32>
    %181 = vector.extract_strided_slice %174 {offsets = [0, 96], sizes = [8, 32], strides = [1, 1]} : vector<8x128xf32> to vector<8x32xf32>
    %182 = math.tanh %181 : vector<8x32xf32>
    %183 = vector.extract_strided_slice %180 {offsets = [0, 0], sizes = [8, 32], strides = [1, 1]} : vector<8x96xf32> to vector<8x32xf32>
    %184 = vector.extract_strided_slice %180 {offsets = [0, 32], sizes = [8, 32], strides = [1, 1]} : vector<8x96xf32> to vector<8x32xf32>
    %185 = vector.extract_strided_slice %180 {offsets = [0, 64], sizes = [8, 32], strides = [1, 1]} : vector<8x96xf32> to vector<8x32xf32>
    %186 = arith.mulf %184, %143 : vector<8x32xf32>
    %187 = arith.mulf %183, %182 : vector<8x32xf32>
    %188 = arith.addf %186, %187 : vector<8x32xf32>
    %189 = math.tanh %188 : vector<8x32xf32>
    %190 = arith.mulf %185, %189 : vector<8x32xf32>
    %c4_i32 = arith.constant 4 : i32
    %c8_i32_61 = arith.constant 8 : i32
    %191 = arith.muli %c4_i32, %c8_i32_61 : i32
    %192 = tpu.assume_multiple %191, 8 : i32
    %193 = arith.index_cast %192 : i32 to index
    %c0_62 = arith.constant 0 : index
    %194 = vector.load %arg10[%193, %c0_62] : memref<64x128xf32, #tpu.memory_space<vmem>>, vector<8x128xf32>
    %c0_63 = arith.constant 0 : index
    %c0_64 = arith.constant 0 : index
    %195 = vector.load %arg2[%c0_63, %c0_64] : memref<32x128xf32, #tpu.memory_space<vmem>>, vector<32x128xf32>
    %cst_65 = arith.constant dense<0.000000e+00> : vector<8x128xf32>
    %196 = tpu.matmul %168, %195, %cst_65 {dimension_numbers = #tpu.dot_dimension_numbers<[1], [0], [0], [1], [0, 0, 1, 1], [], []>} : vector<8x32xf32>, vector<32x128xf32>, vector<8x128xf32> -> vector<8x128xf32>
    %197 = arith.addf %194, %196 : vector<8x128xf32>
    %198 = vector.extract_strided_slice %197 {offsets = [0, 0], sizes = [8, 96], strides = [1, 1]} : vector<8x128xf32> to vector<8x96xf32>
    %199 = arith.negf %198 : vector<8x96xf32>
    %200 = math.exp %199 : vector<8x96xf32>
    %cst_66 = arith.constant 1.000000e+00 : f32
    %201 = vector.broadcast %cst_66 : f32 to vector<8x96xf32>
    %202 = arith.addf %201, %200 : vector<8x96xf32>
    %203 = arith.divf %201, %202 : vector<8x96xf32>
    %204 = vector.extract_strided_slice %197 {offsets = [0, 96], sizes = [8, 32], strides = [1, 1]} : vector<8x128xf32> to vector<8x32xf32>
    %205 = math.tanh %204 : vector<8x32xf32>
    %206 = vector.extract_strided_slice %203 {offsets = [0, 0], sizes = [8, 32], strides = [1, 1]} : vector<8x96xf32> to vector<8x32xf32>
    %207 = vector.extract_strided_slice %203 {offsets = [0, 32], sizes = [8, 32], strides = [1, 1]} : vector<8x96xf32> to vector<8x32xf32>
    %208 = vector.extract_strided_slice %203 {offsets = [0, 64], sizes = [8, 32], strides = [1, 1]} : vector<8x96xf32> to vector<8x32xf32>
    %209 = arith.mulf %207, %166 : vector<8x32xf32>
    %210 = arith.mulf %206, %205 : vector<8x32xf32>
    %211 = arith.addf %209, %210 : vector<8x32xf32>
    %212 = math.tanh %211 : vector<8x32xf32>
    %213 = arith.mulf %208, %212 : vector<8x32xf32>
    %c0_67 = arith.constant 0 : index
    %c0_68 = arith.constant 0 : index
    %214 = vector.load %arg4[%c0_67, %c0_68] : memref<32x128xf32, #tpu.memory_space<vmem>>, vector<32x128xf32>
    %cst_69 = arith.constant dense<0.000000e+00> : vector<8x128xf32>
    %215 = tpu.matmul %213, %214, %cst_69 {dimension_numbers = #tpu.dot_dimension_numbers<[1], [0], [0], [1], [0, 0, 1, 1], [], []>} : vector<8x32xf32>, vector<32x128xf32>, vector<8x128xf32> -> vector<8x128xf32>
    %c0_70 = arith.constant 0 : index
    %c0_71 = arith.constant 0 : index
    %216 = vector.load %arg5[%c0_70, %c0_71] : memref<32x128xf32, #tpu.memory_space<vmem>>, vector<32x128xf32>
    %cst_72 = arith.constant dense<0.000000e+00> : vector<8x128xf32>
    %217 = tpu.matmul %190, %216, %cst_72 {dimension_numbers = #tpu.dot_dimension_numbers<[1], [0], [0], [1], [0, 0, 1, 1], [], []>} : vector<8x32xf32>, vector<32x128xf32>, vector<8x128xf32> -> vector<8x128xf32>
    %218 = arith.addf %215, %217 : vector<8x128xf32>
    %219 = arith.addf %218, %9 : vector<8x128xf32>
    %220 = vector.extract_strided_slice %219 {offsets = [0, 0], sizes = [8, 96], strides = [1, 1]} : vector<8x128xf32> to vector<8x96xf32>
    %221 = arith.negf %220 : vector<8x96xf32>
    %222 = math.exp %221 : vector<8x96xf32>
    %cst_73 = arith.constant 1.000000e+00 : f32
    %223 = vector.broadcast %cst_73 : f32 to vector<8x96xf32>
    %224 = arith.addf %223, %222 : vector<8x96xf32>
    %225 = arith.divf %223, %224 : vector<8x96xf32>
    %226 = vector.extract_strided_slice %219 {offsets = [0, 96], sizes = [8, 32], strides = [1, 1]} : vector<8x128xf32> to vector<8x32xf32>
    %227 = math.tanh %226 : vector<8x32xf32>
    %228 = vector.extract_strided_slice %225 {offsets = [0, 0], sizes = [8, 32], strides = [1, 1]} : vector<8x96xf32> to vector<8x32xf32>
    %229 = vector.extract_strided_slice %225 {offsets = [0, 32], sizes = [8, 32], strides = [1, 1]} : vector<8x96xf32> to vector<8x32xf32>
    %230 = vector.extract_strided_slice %225 {offsets = [0, 64], sizes = [8, 32], strides = [1, 1]} : vector<8x96xf32> to vector<8x32xf32>
    %231 = arith.mulf %229, %188 : vector<8x32xf32>
    %232 = arith.mulf %228, %227 : vector<8x32xf32>
    %233 = arith.addf %231, %232 : vector<8x32xf32>
    %234 = math.tanh %233 : vector<8x32xf32>
    %235 = arith.mulf %230, %234 : vector<8x32xf32>
    %c5_i32 = arith.constant 5 : i32
    %c8_i32_74 = arith.constant 8 : i32
    %236 = arith.muli %c5_i32, %c8_i32_74 : i32
    %237 = tpu.assume_multiple %236, 8 : i32
    %238 = arith.index_cast %237 : i32 to index
    %c0_75 = arith.constant 0 : index
    %239 = vector.load %arg10[%238, %c0_75] : memref<64x128xf32, #tpu.memory_space<vmem>>, vector<8x128xf32>
    %c0_76 = arith.constant 0 : index
    %c0_77 = arith.constant 0 : index
    %240 = vector.load %arg2[%c0_76, %c0_77] : memref<32x128xf32, #tpu.memory_space<vmem>>, vector<32x128xf32>
    %cst_78 = arith.constant dense<0.000000e+00> : vector<8x128xf32>
    %241 = tpu.matmul %213, %240, %cst_78 {dimension_numbers = #tpu.dot_dimension_numbers<[1], [0], [0], [1], [0, 0, 1, 1], [], []>} : vector<8x32xf32>, vector<32x128xf32>, vector<8x128xf32> -> vector<8x128xf32>
    %242 = arith.addf %239, %241 : vector<8x128xf32>
    %243 = vector.extract_strided_slice %242 {offsets = [0, 0], sizes = [8, 96], strides = [1, 1]} : vector<8x128xf32> to vector<8x96xf32>
    %244 = arith.negf %243 : vector<8x96xf32>
    %245 = math.exp %244 : vector<8x96xf32>
    %cst_79 = arith.constant 1.000000e+00 : f32
    %246 = vector.broadcast %cst_79 : f32 to vector<8x96xf32>
    %247 = arith.addf %246, %245 : vector<8x96xf32>
    %248 = arith.divf %246, %247 : vector<8x96xf32>
    %249 = vector.extract_strided_slice %242 {offsets = [0, 96], sizes = [8, 32], strides = [1, 1]} : vector<8x128xf32> to vector<8x32xf32>
    %250 = math.tanh %249 : vector<8x32xf32>
    %251 = vector.extract_strided_slice %248 {offsets = [0, 0], sizes = [8, 32], strides = [1, 1]} : vector<8x96xf32> to vector<8x32xf32>
    %252 = vector.extract_strided_slice %248 {offsets = [0, 32], sizes = [8, 32], strides = [1, 1]} : vector<8x96xf32> to vector<8x32xf32>
    %253 = vector.extract_strided_slice %248 {offsets = [0, 64], sizes = [8, 32], strides = [1, 1]} : vector<8x96xf32> to vector<8x32xf32>
    %254 = arith.mulf %252, %211 : vector<8x32xf32>
    %255 = arith.mulf %251, %250 : vector<8x32xf32>
    %256 = arith.addf %254, %255 : vector<8x32xf32>
    %257 = math.tanh %256 : vector<8x32xf32>
    %258 = arith.mulf %253, %257 : vector<8x32xf32>
    %c0_80 = arith.constant 0 : index
    %c0_81 = arith.constant 0 : index
    %259 = vector.load %arg4[%c0_80, %c0_81] : memref<32x128xf32, #tpu.memory_space<vmem>>, vector<32x128xf32>
    %cst_82 = arith.constant dense<0.000000e+00> : vector<8x128xf32>
    %260 = tpu.matmul %258, %259, %cst_82 {dimension_numbers = #tpu.dot_dimension_numbers<[1], [0], [0], [1], [0, 0, 1, 1], [], []>} : vector<8x32xf32>, vector<32x128xf32>, vector<8x128xf32> -> vector<8x128xf32>
    %c0_83 = arith.constant 0 : index
    %c0_84 = arith.constant 0 : index
    %261 = vector.load %arg5[%c0_83, %c0_84] : memref<32x128xf32, #tpu.memory_space<vmem>>, vector<32x128xf32>
    %cst_85 = arith.constant dense<0.000000e+00> : vector<8x128xf32>
    %262 = tpu.matmul %235, %261, %cst_85 {dimension_numbers = #tpu.dot_dimension_numbers<[1], [0], [0], [1], [0, 0, 1, 1], [], []>} : vector<8x32xf32>, vector<32x128xf32>, vector<8x128xf32> -> vector<8x128xf32>
    %263 = arith.addf %260, %262 : vector<8x128xf32>
    %264 = arith.addf %263, %9 : vector<8x128xf32>
    %265 = vector.extract_strided_slice %264 {offsets = [0, 0], sizes = [8, 96], strides = [1, 1]} : vector<8x128xf32> to vector<8x96xf32>
    %266 = arith.negf %265 : vector<8x96xf32>
    %267 = math.exp %266 : vector<8x96xf32>
    %cst_86 = arith.constant 1.000000e+00 : f32
    %268 = vector.broadcast %cst_86 : f32 to vector<8x96xf32>
    %269 = arith.addf %268, %267 : vector<8x96xf32>
    %270 = arith.divf %268, %269 : vector<8x96xf32>
    %271 = vector.extract_strided_slice %264 {offsets = [0, 96], sizes = [8, 32], strides = [1, 1]} : vector<8x128xf32> to vector<8x32xf32>
    %272 = math.tanh %271 : vector<8x32xf32>
    %273 = vector.extract_strided_slice %270 {offsets = [0, 0], sizes = [8, 32], strides = [1, 1]} : vector<8x96xf32> to vector<8x32xf32>
    %274 = vector.extract_strided_slice %270 {offsets = [0, 32], sizes = [8, 32], strides = [1, 1]} : vector<8x96xf32> to vector<8x32xf32>
    %275 = vector.extract_strided_slice %270 {offsets = [0, 64], sizes = [8, 32], strides = [1, 1]} : vector<8x96xf32> to vector<8x32xf32>
    %276 = arith.mulf %274, %233 : vector<8x32xf32>
    %277 = arith.mulf %273, %272 : vector<8x32xf32>
    %278 = arith.addf %276, %277 : vector<8x32xf32>
    %279 = math.tanh %278 : vector<8x32xf32>
    %280 = arith.mulf %275, %279 : vector<8x32xf32>
    %c6_i32 = arith.constant 6 : i32
    %c8_i32_87 = arith.constant 8 : i32
    %281 = arith.muli %c6_i32, %c8_i32_87 : i32
    %282 = tpu.assume_multiple %281, 8 : i32
    %283 = arith.index_cast %282 : i32 to index
    %c0_88 = arith.constant 0 : index
    %284 = vector.load %arg10[%283, %c0_88] : memref<64x128xf32, #tpu.memory_space<vmem>>, vector<8x128xf32>
    %c0_89 = arith.constant 0 : index
    %c0_90 = arith.constant 0 : index
    %285 = vector.load %arg2[%c0_89, %c0_90] : memref<32x128xf32, #tpu.memory_space<vmem>>, vector<32x128xf32>
    %cst_91 = arith.constant dense<0.000000e+00> : vector<8x128xf32>
    %286 = tpu.matmul %258, %285, %cst_91 {dimension_numbers = #tpu.dot_dimension_numbers<[1], [0], [0], [1], [0, 0, 1, 1], [], []>} : vector<8x32xf32>, vector<32x128xf32>, vector<8x128xf32> -> vector<8x128xf32>
    %287 = arith.addf %284, %286 : vector<8x128xf32>
    %288 = vector.extract_strided_slice %287 {offsets = [0, 0], sizes = [8, 96], strides = [1, 1]} : vector<8x128xf32> to vector<8x96xf32>
    %289 = arith.negf %288 : vector<8x96xf32>
    %290 = math.exp %289 : vector<8x96xf32>
    %cst_92 = arith.constant 1.000000e+00 : f32
    %291 = vector.broadcast %cst_92 : f32 to vector<8x96xf32>
    %292 = arith.addf %291, %290 : vector<8x96xf32>
    %293 = arith.divf %291, %292 : vector<8x96xf32>
    %294 = vector.extract_strided_slice %287 {offsets = [0, 96], sizes = [8, 32], strides = [1, 1]} : vector<8x128xf32> to vector<8x32xf32>
    %295 = math.tanh %294 : vector<8x32xf32>
    %296 = vector.extract_strided_slice %293 {offsets = [0, 0], sizes = [8, 32], strides = [1, 1]} : vector<8x96xf32> to vector<8x32xf32>
    %297 = vector.extract_strided_slice %293 {offsets = [0, 32], sizes = [8, 32], strides = [1, 1]} : vector<8x96xf32> to vector<8x32xf32>
    %298 = vector.extract_strided_slice %293 {offsets = [0, 64], sizes = [8, 32], strides = [1, 1]} : vector<8x96xf32> to vector<8x32xf32>
    %299 = arith.mulf %297, %256 : vector<8x32xf32>
    %300 = arith.mulf %296, %295 : vector<8x32xf32>
    %301 = arith.addf %299, %300 : vector<8x32xf32>
    %302 = math.tanh %301 : vector<8x32xf32>
    %303 = arith.mulf %298, %302 : vector<8x32xf32>
    %c0_93 = arith.constant 0 : index
    %c0_94 = arith.constant 0 : index
    %304 = vector.load %arg4[%c0_93, %c0_94] : memref<32x128xf32, #tpu.memory_space<vmem>>, vector<32x128xf32>
    %cst_95 = arith.constant dense<0.000000e+00> : vector<8x128xf32>
    %305 = tpu.matmul %303, %304, %cst_95 {dimension_numbers = #tpu.dot_dimension_numbers<[1], [0], [0], [1], [0, 0, 1, 1], [], []>} : vector<8x32xf32>, vector<32x128xf32>, vector<8x128xf32> -> vector<8x128xf32>
    %c0_96 = arith.constant 0 : index
    %c0_97 = arith.constant 0 : index
    %306 = vector.load %arg5[%c0_96, %c0_97] : memref<32x128xf32, #tpu.memory_space<vmem>>, vector<32x128xf32>
    %cst_98 = arith.constant dense<0.000000e+00> : vector<8x128xf32>
    %307 = tpu.matmul %280, %306, %cst_98 {dimension_numbers = #tpu.dot_dimension_numbers<[1], [0], [0], [1], [0, 0, 1, 1], [], []>} : vector<8x32xf32>, vector<32x128xf32>, vector<8x128xf32> -> vector<8x128xf32>
    %308 = arith.addf %305, %307 : vector<8x128xf32>
    %309 = arith.addf %308, %9 : vector<8x128xf32>
    %310 = vector.extract_strided_slice %309 {offsets = [0, 0], sizes = [8, 96], strides = [1, 1]} : vector<8x128xf32> to vector<8x96xf32>
    %311 = arith.negf %310 : vector<8x96xf32>
    %312 = math.exp %311 : vector<8x96xf32>
    %cst_99 = arith.constant 1.000000e+00 : f32
    %313 = vector.broadcast %cst_99 : f32 to vector<8x96xf32>
    %314 = arith.addf %313, %312 : vector<8x96xf32>
    %315 = arith.divf %313, %314 : vector<8x96xf32>
    %316 = vector.extract_strided_slice %309 {offsets = [0, 96], sizes = [8, 32], strides = [1, 1]} : vector<8x128xf32> to vector<8x32xf32>
    %317 = math.tanh %316 : vector<8x32xf32>
    %318 = vector.extract_strided_slice %315 {offsets = [0, 0], sizes = [8, 32], strides = [1, 1]} : vector<8x96xf32> to vector<8x32xf32>
    %319 = vector.extract_strided_slice %315 {offsets = [0, 32], sizes = [8, 32], strides = [1, 1]} : vector<8x96xf32> to vector<8x32xf32>
    %320 = vector.extract_strided_slice %315 {offsets = [0, 64], sizes = [8, 32], strides = [1, 1]} : vector<8x96xf32> to vector<8x32xf32>
    %321 = arith.mulf %319, %278 : vector<8x32xf32>
    %322 = arith.mulf %318, %317 : vector<8x32xf32>
    %323 = arith.addf %321, %322 : vector<8x32xf32>
    %324 = math.tanh %323 : vector<8x32xf32>
    %325 = arith.mulf %320, %324 : vector<8x32xf32>
    %c7_i32 = arith.constant 7 : i32
    %c8_i32_100 = arith.constant 8 : i32
    %326 = arith.muli %c7_i32, %c8_i32_100 : i32
    %327 = tpu.assume_multiple %326, 8 : i32
    %328 = arith.index_cast %327 : i32 to index
    %c0_101 = arith.constant 0 : index
    %329 = vector.load %arg10[%328, %c0_101] : memref<64x128xf32, #tpu.memory_space<vmem>>, vector<8x128xf32>
    %c0_102 = arith.constant 0 : index
    %c0_103 = arith.constant 0 : index
    %330 = vector.load %arg2[%c0_102, %c0_103] : memref<32x128xf32, #tpu.memory_space<vmem>>, vector<32x128xf32>
    %cst_104 = arith.constant dense<0.000000e+00> : vector<8x128xf32>
    %331 = tpu.matmul %303, %330, %cst_104 {dimension_numbers = #tpu.dot_dimension_numbers<[1], [0], [0], [1], [0, 0, 1, 1], [], []>} : vector<8x32xf32>, vector<32x128xf32>, vector<8x128xf32> -> vector<8x128xf32>
    %332 = arith.addf %329, %331 : vector<8x128xf32>
    %333 = vector.extract_strided_slice %332 {offsets = [0, 0], sizes = [8, 96], strides = [1, 1]} : vector<8x128xf32> to vector<8x96xf32>
    %334 = arith.negf %333 : vector<8x96xf32>
    %335 = math.exp %334 : vector<8x96xf32>
    %cst_105 = arith.constant 1.000000e+00 : f32
    %336 = vector.broadcast %cst_105 : f32 to vector<8x96xf32>
    %337 = arith.addf %336, %335 : vector<8x96xf32>
    %338 = arith.divf %336, %337 : vector<8x96xf32>
    %339 = vector.extract_strided_slice %332 {offsets = [0, 96], sizes = [8, 32], strides = [1, 1]} : vector<8x128xf32> to vector<8x32xf32>
    %340 = math.tanh %339 : vector<8x32xf32>
    %341 = vector.extract_strided_slice %338 {offsets = [0, 0], sizes = [8, 32], strides = [1, 1]} : vector<8x96xf32> to vector<8x32xf32>
    %342 = vector.extract_strided_slice %338 {offsets = [0, 32], sizes = [8, 32], strides = [1, 1]} : vector<8x96xf32> to vector<8x32xf32>
    %343 = vector.extract_strided_slice %338 {offsets = [0, 64], sizes = [8, 32], strides = [1, 1]} : vector<8x96xf32> to vector<8x32xf32>
    %344 = arith.mulf %342, %301 : vector<8x32xf32>
    %345 = arith.mulf %341, %340 : vector<8x32xf32>
    %346 = arith.addf %344, %345 : vector<8x32xf32>
    %347 = math.tanh %346 : vector<8x32xf32>
    %348 = arith.mulf %343, %347 : vector<8x32xf32>
    %c0_106 = arith.constant 0 : index
    %c0_107 = arith.constant 0 : index
    %349 = vector.load %arg4[%c0_106, %c0_107] : memref<32x128xf32, #tpu.memory_space<vmem>>, vector<32x128xf32>
    %cst_108 = arith.constant dense<0.000000e+00> : vector<8x128xf32>
    %350 = tpu.matmul %348, %349, %cst_108 {dimension_numbers = #tpu.dot_dimension_numbers<[1], [0], [0], [1], [0, 0, 1, 1], [], []>} : vector<8x32xf32>, vector<32x128xf32>, vector<8x128xf32> -> vector<8x128xf32>
    %c0_109 = arith.constant 0 : index
    %c0_110 = arith.constant 0 : index
    %351 = vector.load %arg5[%c0_109, %c0_110] : memref<32x128xf32, #tpu.memory_space<vmem>>, vector<32x128xf32>
    %cst_111 = arith.constant dense<0.000000e+00> : vector<8x128xf32>
    %352 = tpu.matmul %325, %351, %cst_111 {dimension_numbers = #tpu.dot_dimension_numbers<[1], [0], [0], [1], [0, 0, 1, 1], [], []>} : vector<8x32xf32>, vector<32x128xf32>, vector<8x128xf32> -> vector<8x128xf32>
    %353 = arith.addf %350, %352 : vector<8x128xf32>
    %354 = arith.addf %353, %9 : vector<8x128xf32>
    %355 = vector.extract_strided_slice %354 {offsets = [0, 0], sizes = [8, 96], strides = [1, 1]} : vector<8x128xf32> to vector<8x96xf32>
    %356 = arith.negf %355 : vector<8x96xf32>
    %357 = math.exp %356 : vector<8x96xf32>
    %cst_112 = arith.constant 1.000000e+00 : f32
    %358 = vector.broadcast %cst_112 : f32 to vector<8x96xf32>
    %359 = arith.addf %358, %357 : vector<8x96xf32>
    %360 = arith.divf %358, %359 : vector<8x96xf32>
    %361 = vector.extract_strided_slice %354 {offsets = [0, 96], sizes = [8, 32], strides = [1, 1]} : vector<8x128xf32> to vector<8x32xf32>
    %362 = math.tanh %361 : vector<8x32xf32>
    %363 = vector.extract_strided_slice %360 {offsets = [0, 0], sizes = [8, 32], strides = [1, 1]} : vector<8x96xf32> to vector<8x32xf32>
    %364 = vector.extract_strided_slice %360 {offsets = [0, 32], sizes = [8, 32], strides = [1, 1]} : vector<8x96xf32> to vector<8x32xf32>
    %365 = vector.extract_strided_slice %360 {offsets = [0, 64], sizes = [8, 32], strides = [1, 1]} : vector<8x96xf32> to vector<8x32xf32>
    %366 = arith.mulf %364, %323 : vector<8x32xf32>
    %367 = arith.mulf %363, %362 : vector<8x32xf32>
    %368 = arith.addf %366, %367 : vector<8x32xf32>
    %369 = math.tanh %368 : vector<8x32xf32>
    %370 = arith.mulf %365, %369 : vector<8x32xf32>
    %c8_i32_113 = arith.constant 8 : i32
    %c0_114 = arith.constant 0 : index
    %c0_115 = arith.constant 0 : index
    %371 = vector.load %arg7[%c0_114, %c0_115] : memref<1x32xf32, #tpu.memory_space<vmem>>, vector<1x32xf32>
    %372 = vector.broadcast %371 : vector<1x32xf32> to vector<8x32xf32>
    %373 = arith.mulf %370, %372 : vector<8x32xf32>
    %cst_116 = arith.constant dense<0.000000e+00> : vector<8xf32>
    %374 = vector.multi_reduction <add>, %373, %cst_116 [1] : vector<8x32xf32> to vector<8xf32>
    %375 = vector.shape_cast %374 : vector<8xf32> to vector<8x1xf32>
    %c0_117 = arith.constant 0 : index
    %c0_118 = arith.constant 0 : index
    %376 = vector.load %arg8[%c0_117, %c0_118] : memref<1x1xf32, #tpu.memory_space<vmem>>, vector<1x1xf32>
    %377 = vector.broadcast %376 : vector<1x1xf32> to vector<8x1xf32>
    %378 = arith.addf %375, %377 : vector<8x1xf32>
    %c0_119 = arith.constant 0 : index
    %c0_120 = arith.constant 0 : index
    %379 = vector.load %arg9[%c0_119, %c0_120] : memref<8x1xf32, #tpu.memory_space<vmem>>, vector<8x1xf32>
    tpu.vector_store %arg9[%c0_119, %c0_120], %378 {strides = array<i32>} : memref<8x1xf32, #tpu.memory_space<vmem>>, vector<8x1xf32>,
    return
  }
}

</mosaic_0001>

<llo_original>
// kernel: lstm_forward.1
$region0: #{lstm_forward.1}
  #allocation0 [shape = 'u32[]', space=smem, size = 0x4, offset = 0x4, fixed_abs, tag = 'smem constant byte address 0x4 - core index']
  #allocation1 [shape = 'u32[72,128]{1,0:T(1,128)}', space=vmem, size = 0x9000, scoped, tag = 'internal scratch']
  #allocation2 [shape = 'f32[64,128]{1,0:T(8,128)}', space=vmem, size = 0x8000, scoped, tag = 'scratch operand']
  #allocation3 [shape = 'f32[1,1]{1,0:T(1,128)S(1)}', space=vmem, size = 0x200, scoped, tag = 'scoped memory for lstm_forward.1']
  %s0 = inlined_call_operand.vmem [shape: f32[64,4], index: 0, kind: input, shape index: {}]
  %s1 = inlined_call_operand.vmem [shape: f32[4,128], index: 1, kind: input, shape index: {}]
  %s2 = inlined_call_operand.vmem [shape: f32[32,128], index: 2, kind: input, shape index: {}]
  %s3 = inlined_call_operand.vmem [shape: f32[1,128], index: 3, kind: input, shape index: {}]
  %s4 = inlined_call_operand.vmem [shape: f32[32,128], index: 4, kind: input, shape index: {}]
  %s5 = inlined_call_operand.vmem [shape: f32[32,128], index: 5, kind: input, shape index: {}]
  %s6 = inlined_call_operand.vmem [shape: f32[1,128], index: 6, kind: input, shape index: {}]
  %s7 = inlined_call_operand.vmem [shape: f32[1,32], index: 7, kind: input, shape index: {}]
  %s8 = inlined_call_operand.<no memory space> [shape: f32[1,1], index: 8, kind: input, shape index: {}]
  %s9 = inlined_call_operand.vmem [shape: f32[8,1], index: 9, kind: output, shape index: {}]
  %s10 = sld [smem:[#allocation0]]
  $region46: #{lstm_forward.1} parent=0
    _
  %s12 = ssub.s32 1, %s10
  %s13 = scalar_select 0, %s12, %s10
  %v14 = vstv %s8
  %15 = vst [vmem:[#allocation3] sm:$0x1] %v14
  // Predicated region
  $region2: #{lstm_forward.1} parent=0 // pred_check
    _
  $region3: #{lstm_forward.1} parent=0 // pred_check_branch
    %17 = sbr.rel (0) target = $region5
  $region4: #{lstm_forward.1} parent=0 // pred_region
    _
  $region5: #{lstm_forward.1} parent=0 // pred_fallthru
    _
  // Predicated region
  $region6: #{lstm_forward.1} parent=0 // pred_check
    _
  $region7: #{lstm_forward.1} parent=0 // pred_check_branch
    %19 = sbr.rel (0) target = $region9
  $region8: #{lstm_forward.1} parent=0 // pred_region
    _
  $region9: #{lstm_forward.1} parent=0 // pred_fallthru
    _
  // Predicated region
  $region10: #{lstm_forward.1} parent=0 // pred_check
    _
  $region11: #{lstm_forward.1} parent=0 // pred_check_branch
    %21 = sbr.rel (0) target = $region13
  $region12: #{lstm_forward.1} parent=0 // pred_region
    _
  $region13: #{lstm_forward.1} parent=0 // pred_fallthru
    _
  // Predicated region
  $region14: #{lstm_forward.1} parent=0 // pred_check
    _
  $region15: #{lstm_forward.1} parent=0 // pred_check_branch
    %23 = sbr.rel (0) target = $region17
  $region16: #{lstm_forward.1} parent=0 // pred_region
    _
  $region17: #{lstm_forward.1} parent=0 // pred_fallthru
    _
  // Predicated region
  $region18: #{lstm_forward.1} parent=0 // pred_check
    _
  $region19: #{lstm_forward.1} parent=0 // pred_check_branch
    %25 = sbr.rel (0) target = $region21
  $region20: #{lstm_forward.1} parent=0 // pred_region
    _
  $region21: #{lstm_forward.1} parent=0 // pred_fallthru
    _
  // Predicated region
  $region22: #{lstm_forward.1} parent=0 // pred_check
    _
  $region23: #{lstm_forward.1} parent=0 // pred_check_branch
    %27 = sbr.rel (0) target = $region25
  $region24: #{lstm_forward.1} parent=0 // pred_region
    _
  $region25: #{lstm_forward.1} parent=0 // pred_fallthru
    _
  // Predicated region
  $region26: #{lstm_forward.1} parent=0 // pred_check
    _
  $region27: #{lstm_forward.1} parent=0 // pred_check_branch
    %29 = sbr.rel (0) target = $region29
  $region28: #{lstm_forward.1} parent=0 // pred_region
    _
  $region29: #{lstm_forward.1} parent=0 // pred_fallthru
    _
  // Predicated region
  $region30: #{lstm_forward.1} parent=0 // pred_check
    _
  $region31: #{lstm_forward.1} parent=0 // pred_check_branch
    %31 = sbr.rel (0) target = $region33
  $region32: #{lstm_forward.1} parent=0 // pred_region
    _
  $region33: #{lstm_forward.1} parent=0 // pred_fallthru
    _
  // Predicated region
  $region34: #{lstm_forward.1} parent=0 // pred_check
    _
  $region35: #{lstm_forward.1} parent=0 // pred_check_branch
    %33 = sbr.rel (0) target = $region37
  $region36: #{lstm_forward.1} parent=0 // pred_region
    _
  $region37: #{lstm_forward.1} parent=0 // pred_fallthru
    _
  %v34 = vld [vmem:[%s0] sm:$0xff]
  %v35 = vld [vmem:[%s0 + $0x8] sm:$0xff]
  %v36 = vld [vmem:[%s0 + $0x10] sm:$0xff]
  %v37 = vld [vmem:[%s0 + $0x18] sm:$0xff]
  %v38 = vld [vmem:[%s0 + $0x20] sm:$0xff]
  %v39 = vld [vmem:[%s0 + $0x28] sm:$0xff]
  %v40 = vld [vmem:[%s0 + $0x30] sm:$0xff]
  %v41 = vld [vmem:[%s0 + $0x38] sm:$0xff]
  %v42 = vld [vmem:[%s1] sm:$0xf]
  %v43 = vld [vmem:[%s3] sm:$0x1]
  %v45 = vperm.slane %v43, 0
  %vm47 = vcmask 31744
  %v49 = vsel %vm47, %v34, 0
  %v52 = vsel %vm47, %v35, 0
  %v55 = vsel %vm47, %v36, 0
  %v58 = vsel %vm47, %v37, 0
  %v61 = vsel %vm47, %v38, 0
  %v64 = vsel %vm47, %v39, 0
  %v67 = vsel %vm47, %v40, 0
  %v70 = vsel %vm47, %v41, 0
  %vm72 = vcmask 1043456
  %v74 = vsel %vm72, %v42, 0
  %76 = vmatpush.msra.mxu0 0.0
  %77 = vmatpush.msra.mxu0 0.0
  %78 = vmatpush.msra.mxu0 0.0
  %79 = vmatpush.msra.mxu0 0.0
  %80 = vmatpush.msra.mxu0 0.0
  %81 = vmatpush.msra.mxu0 0.0
  %82 = vmatpush.msra.mxu0 0.0
  %83 = vmatpush.msra.mxu0 0.0
  %84 = vmatpush.msra.mxu0 0.0
  %85 = vmatpush.msra.mxu0 0.0
  %86 = vmatpush.msra.mxu0 0.0
  %87 = vmatpush.msra.mxu0 0.0
  %88 = vmatpush.msra.mxu0 0.0
  %89 = vmatpush.msra.mxu0 0.0
  %90 = vmatpush.msra.mxu0 0.0
  %91 = vmatpush.msra.mxu0 %v74
  %92 = vmatmul.f32.gmra.mxu0 %v49
  %v93 = vpop.f32.mrf.mxu0
  %v94 = vadd.f32 %v45, %v93
  %95 = vmatmul.f32.gmra.mxu0 %v52
  %v96 = vpop.f32.mrf.mxu0
  %v97 = vadd.f32 %v45, %v96
  %98 = vmatmul.f32.gmra.mxu0 %v55
  %v99 = vpop.f32.mrf.mxu0
  %v100 = vadd.f32 %v45, %v99
  %101 = vmatmul.f32.gmra.mxu0 %v58
  %v102 = vpop.f32.mrf.mxu0
  %v103 = vadd.f32 %v45, %v102
  %104 = vmatmul.f32.gmra.mxu0 %v61
  %v105 = vpop.f32.mrf.mxu0
  %v106 = vadd.f32 %v45, %v105
  %107 = vmatmul.f32.gmra.mxu0 %v64
  %v108 = vpop.f32.mrf.mxu0
  %v109 = vadd.f32 %v45, %v108
  %110 = vmatmul.f32.gmra.mxu0 %v67
  %v111 = vpop.f32.mrf.mxu0
  %v112 = vadd.f32 %v45, %v111
  %113 = vmatmul.f32.gmra.mxu0 %v70
  %v114 = vpop.f32.mrf.mxu0
  %v115 = vadd.f32 %v45, %v114
  %116 = vdwg.mxu0
  %117 = vst [vmem:[#allocation2] sm:$0xff] %v94
  %118 = vst [vmem:[#allocation2 + $0x8] sm:$0xff] %v97
  %119 = vst [vmem:[#allocation2 + $0x10] sm:$0xff] %v100
  %120 = vst [vmem:[#allocation2 + $0x18] sm:$0xff] %v103
  %121 = vst [vmem:[#allocation2 + $0x20] sm:$0xff] %v106
  %122 = vst [vmem:[#allocation2 + $0x28] sm:$0xff] %v109
  %123 = vst [vmem:[#allocation2 + $0x30] sm:$0xff] %v112
  %124 = vst [vmem:[#allocation2 + $0x38] sm:$0xff] %v115
  %v125 = vld [vmem:[%s6] sm:$0x1]
  %v127 = vperm.slane %v125, 0
  %v129 = vld [vmem:[#allocation2] sm:$0xff]
  %v130 = vld [vmem:[%s2] sm:$0xff]
  %v131 = vld [vmem:[%s2 + $0x8] sm:$0xff]
  %v132 = vld [vmem:[%s2 + $0x10] sm:$0xff]
  %v133 = vld [vmem:[%s2 + $0x18] sm:$0xff]
  %vm134 = vcmask 261120
  %v136 = vsel %vm134, 0.0, 0
  %138 = vmatpush.msra.mxu0 0.0
  %139 = vmatpush.msra.mxu0 0.0
  %140 = vmatpush.msra.mxu0 0.0
  %141 = vmatpush.msra.mxu0 0.0
  %142 = vmatpush.msra.mxu0 0.0
  %143 = vmatpush.msra.mxu0 0.0
  %144 = vmatpush.msra.mxu0 0.0
  %145 = vmatpush.msra.mxu0 0.0
  %146 = vmatpush.msra.mxu0 0.0
  %147 = vmatpush.msra.mxu0 0.0
  %148 = vmatpush.msra.mxu0 0.0
  %149 = vmatpush.msra.mxu0 0.0
  %150 = vmatpush.msra.mxu0 %v133
  %151 = vmatpush.msra.mxu0 %v132
  %152 = vmatpush.msra.mxu0 %v131
  %153 = vmatpush.msra.mxu0 %v130
  %154 = vmatmul.f32.gmra.mxu0 %v136
  %v155 = vpop.f32.mrf.mxu0
  %v156 = vadd.f32 0.0, %v155
  %157 = vdwg.mxu0
  %v158 = vadd.f32 %v129, %v156
  %v159 = vxor.u32 %v158, 2147483648
  %v160 = vmul.f32 %v159, 1.442695
  %v161 = vpow.pop %v160
  %v162 = vadd.f32 %v161, 1.0
  %v163 = vrcp.pop %v162
  %v164 = vmul.f32 %v162, %v163
  %v165 = vsub.f32 1.0, %v164
  %v166 = vmul.f32 %v163, %v165
  %v167 = vadd.f32 %v163, %v166
  %vm168 = vweird.f32 %v162
  %vm169 = vweird.f32 %v163
  %vm170 = vmor %vm168, %vm169
  %v171 = vsel %vm170, %v163, %v167
  %v172 = vand.u32 2147483647, %v162
  %vm173 = vcmp.eq.f32.partialorder %v172, 8.507059e+37
  %v174 = vand.u32 %v162, 2147483648
  %v175 = vor.u32 1.1754944e-38, %v174
  %v176 = vsel %vm173, %v175, %v171
  %v177 = vmul.f32 1.0, %v176
  %v178 = vtanh.pop %v158
  %v179 = vmul.f32 %v177, 0.0
  %181 = vrot.lane.b32.xlu0 %v178, 32
  %v182 = vpop.permute.xlu0 %181
  %v184 = vmul.f32 %v177, %v182
  %186 = vrot.lane.b32.xlu0 %v184, 32
  %v187 = vpop.permute.xlu0 %186
  %v189 = vadd.f32 %v179, %v187
  %v190 = vtanh.pop %v189
  %192 = vrot.lane.b32.xlu0 %v190, 32
  %v193 = vpop.permute.xlu0 %192
  %v195 = vmul.f32 %v177, %v193
  %v196 = vld [vmem:[%s4] sm:$0xff]
  %v197 = vld [vmem:[%s4 + $0x8] sm:$0xff]
  %v198 = vld [vmem:[%s4 + $0x10] sm:$0xff]
  %v199 = vld [vmem:[%s4 + $0x18] sm:$0xff]
  %v200 = vld [vmem:[%s5] sm:$0xff]
  %v201 = vld [vmem:[%s5 + $0x8] sm:$0xff]
  %v202 = vld [vmem:[%s5 + $0x10] sm:$0xff]
  %v203 = vld [vmem:[%s5 + $0x18] sm:$0xff]
  %204 = vmatpush.msra.mxu0 0.0
  %205 = vmatpush.msra.mxu0 0.0
  %206 = vmatpush.msra.mxu0 0.0
  %207 = vmatpush.msra.mxu0 0.0
  %208 = vmatpush.msra.mxu0 0.0
  %209 = vmatpush.msra.mxu0 0.0
  %210 = vmatpush.msra.mxu0 0.0
  %211 = vmatpush.msra.mxu0 0.0
  %212 = vmatpush.msra.mxu0 0.0
  %213 = vmatpush.msra.mxu0 0.0
  %214 = vmatpush.msra.mxu0 0.0
  %215 = vmatpush.msra.mxu0 0.0
  %216 = vmatpush.msra.mxu0 %v203
  %217 = vmatpush.msra.mxu0 %v202
  %218 = vmatpush.msra.mxu0 %v201
  %219 = vmatpush.msra.mxu0 %v200
  %220 = vmatmul.f32.gmra.mxu0 %v136
  %v221 = vpop.f32.mrf.mxu0
  %v222 = vadd.f32 0.0, %v221
  %223 = vdwg.mxu0
  %225 = vrot.lane.b32.xlu0 %v195, 64
  %v226 = vpop.permute.xlu0 %225
  %v227 = vsel %vm134, %v226, 0
  %229 = vmatpush.msra.mxu0 0.0
  %230 = vmatpush.msra.mxu0 0.0
  %231 = vmatpush.msra.mxu0 0.0
  %232 = vmatpush.msra.mxu0 0.0
  %233 = vmatpush.msra.mxu0 0.0
  %234 = vmatpush.msra.mxu0 0.0
  %235 = vmatpush.msra.mxu0 0.0
  %236 = vmatpush.msra.mxu0 0.0
  %237 = vmatpush.msra.mxu0 0.0
  %238 = vmatpush.msra.mxu0 0.0
  %239 = vmatpush.msra.mxu0 0.0
  %240 = vmatpush.msra.mxu0 0.0
  %241 = vmatpush.msra.mxu0 %v199
  %242 = vmatpush.msra.mxu0 %v198
  %243 = vmatpush.msra.mxu0 %v197
  %244 = vmatpush.msra.mxu0 %v196
  %245 = vmatmul.f32.gmra.mxu0 %v227
  %v246 = vpop.f32.mrf.mxu0
  %v247 = vadd.f32 %v222, %v246
  %248 = vdwg.mxu0
  %v249 = vadd.f32 %v247, %v127
  %v250 = vxor.u32 %v249, 2147483648
  %v251 = vmul.f32 %v250, 1.442695
  %v252 = vpow.pop %v251
  %v253 = vadd.f32 %v252, 1.0
  %v254 = vrcp.pop %v253
  %v255 = vmul.f32 %v253, %v254
  %v256 = vsub.f32 1.0, %v255
  %v257 = vmul.f32 %v254, %v256
  %v258 = vadd.f32 %v254, %v257
  %vm259 = vweird.f32 %v253
  %vm260 = vweird.f32 %v254
  %vm261 = vmor %vm259, %vm260
  %v262 = vsel %vm261, %v254, %v258
  %v263 = vand.u32 2147483647, %v253
  %vm264 = vcmp.eq.f32.partialorder %v263, 8.507059e+37
  %v265 = vand.u32 %v253, 2147483648
  %v266 = vor.u32 1.1754944e-38, %v265
  %v267 = vsel %vm264, %v266, %v262
  %v268 = vmul.f32 1.0, %v267
  %v269 = vtanh.pop %v249
  %v270 = vmul.f32 %v268, 0.0
  %272 = vrot.lane.b32.xlu0 %v269, 32
  %v273 = vpop.permute.xlu0 %272
  %v275 = vmul.f32 %v268, %v273
  %277 = vrot.lane.b32.xlu0 %v275, 32
  %v278 = vpop.permute.xlu0 %277
  %v280 = vadd.f32 %v270, %v278
  %v281 = vtanh.pop %v280
  %283 = vrot.lane.b32.xlu0 %v281, 32
  %v284 = vpop.permute.xlu0 %283
  %v286 = vmul.f32 %v268, %v284
  %s287 = scalar_lea.vmem [#allocation2], 8
  %v288 = vld [vmem:[%s287] sm:$0xff]
  %289 = vmatpush.msra.mxu0 0.0
  %290 = vmatpush.msra.mxu0 0.0
  %291 = vmatpush.msra.mxu0 0.0
  %292 = vmatpush.msra.mxu0 0.0
  %293 = vmatpush.msra.mxu0 0.0
  %294 = vmatpush.msra.mxu0 0.0
  %295 = vmatpush.msra.mxu0 0.0
  %296 = vmatpush.msra.mxu0 0.0
  %297 = vmatpush.msra.mxu0 0.0
  %298 = vmatpush.msra.mxu0 0.0
  %299 = vmatpush.msra.mxu0 0.0
  %300 = vmatpush.msra.mxu0 0.0
  %301 = vmatpush.msra.mxu0 %v133
  %302 = vmatpush.msra.mxu0 %v132
  %303 = vmatpush.msra.mxu0 %v131
  %304 = vmatpush.msra.mxu0 %v130
  %305 = vmatmul.f32.gmra.mxu0 %v227
  %v306 = vpop.f32.mrf.mxu0
  %v307 = vadd.f32 0.0, %v306
  %308 = vdwg.mxu0
  %v309 = vadd.f32 %v288, %v307
  %v310 = vxor.u32 %v309, 2147483648
  %v311 = vmul.f32 %v310, 1.442695
  %v312 = vpow.pop %v311
  %v313 = vadd.f32 %v312, 1.0
  %v314 = vrcp.pop %v313
  %v315 = vmul.f32 %v313, %v314
  %v316 = vsub.f32 1.0, %v315
  %v317 = vmul.f32 %v314, %v316
  %v318 = vadd.f32 %v314, %v317
  %vm319 = vweird.f32 %v313
  %vm320 = vweird.f32 %v314
  %vm321 = vmor %vm319, %vm320
  %v322 = vsel %vm321, %v314, %v318
  %v323 = vand.u32 2147483647, %v313
  %vm324 = vcmp.eq.f32.partialorder %v323, 8.507059e+37
  %v325 = vand.u32 %v313, 2147483648
  %v326 = vor.u32 1.1754944e-38, %v325
  %v327 = vsel %vm324, %v326, %v322
  %v328 = vmul.f32 1.0, %v327
  %v329 = vtanh.pop %v309
  %v330 = vmul.f32 %v328, %v189
  %332 = vrot.lane.b32.xlu0 %v329, 32
  %v333 = vpop.permute.xlu0 %332
  %v335 = vmul.f32 %v328, %v333
  %337 = vrot.lane.b32.xlu0 %v335, 32
  %v338 = vpop.permute.xlu0 %337
  %v340 = vadd.f32 %v330, %v338
  %v341 = vtanh.pop %v340
  %343 = vrot.lane.b32.xlu0 %v341, 32
  %v344 = vpop.permute.xlu0 %343
  %v346 = vmul.f32 %v328, %v344
  %348 = vrot.lane.b32.xlu0 %v286, 64
  %v349 = vpop.permute.xlu0 %348
  %v350 = vsel %vm134, %v349, 0
  %352 = vmatpush.msra.mxu0 0.0
  %353 = vmatpush.msra.mxu0 0.0
  %354 = vmatpush.msra.mxu0 0.0
  %355 = vmatpush.msra.mxu0 0.0
  %356 = vmatpush.msra.mxu0 0.0
  %357 = vmatpush.msra.mxu0 0.0
  %358 = vmatpush.msra.mxu0 0.0
  %359 = vmatpush.msra.mxu0 0.0
  %360 = vmatpush.msra.mxu0 0.0
  %361 = vmatpush.msra.mxu0 0.0
  %362 = vmatpush.msra.mxu0 0.0
  %363 = vmatpush.msra.mxu0 0.0
  %364 = vmatpush.msra.mxu0 %v203
  %365 = vmatpush.msra.mxu0 %v202
  %366 = vmatpush.msra.mxu0 %v201
  %367 = vmatpush.msra.mxu0 %v200
  %368 = vmatmul.f32.gmra.mxu0 %v350
  %v369 = vpop.f32.mrf.mxu0
  %v370 = vadd.f32 0.0, %v369
  %371 = vdwg.mxu0
  %373 = vrot.lane.b32.xlu0 %v346, 64
  %v374 = vpop.permute.xlu0 %373
  %v375 = vsel %vm134, %v374, 0
  %377 = vmatpush.msra.mxu0 0.0
  %378 = vmatpush.msra.mxu0 0.0
  %379 = vmatpush.msra.mxu0 0.0
  %380 = vmatpush.msra.mxu0 0.0
  %381 = vmatpush.msra.mxu0 0.0
  %382 = vmatpush.msra.mxu0 0.0
  %383 = vmatpush.msra.mxu0 0.0
  %384 = vmatpush.msra.mxu0 0.0
  %385 = vmatpush.msra.mxu0 0.0
  %386 = vmatpush.msra.mxu0 0.0
  %387 = vmatpush.msra.mxu0 0.0
  %388 = vmatpush.msra.mxu0 0.0
  %389 = vmatpush.msra.mxu0 %v199
  %390 = vmatpush.msra.mxu0 %v198
  %391 = vmatpush.msra.mxu0 %v197
  %392 = vmatpush.msra.mxu0 %v196
  %393 = vmatmul.f32.gmra.mxu0 %v375
  %v394 = vpop.f32.mrf.mxu0
  %v395 = vadd.f32 %v370, %v394
  %396 = vdwg.mxu0
  %v397 = vadd.f32 %v395, %v127
  %v398 = vxor.u32 %v397, 2147483648
  %v399 = vmul.f32 %v398, 1.442695
  %v400 = vpow.pop %v399
  %v401 = vadd.f32 %v400, 1.0
  %v402 = vrcp.pop %v401
  %v403 = vmul.f32 %v401, %v402
  %v404 = vsub.f32 1.0, %v403
  %v405 = vmul.f32 %v402, %v404
  %v406 = vadd.f32 %v402, %v405
  %vm407 = vweird.f32 %v401
  %vm408 = vweird.f32 %v402
  %vm409 = vmor %vm407, %vm408
  %v410 = vsel %vm409, %v402, %v406
  %v411 = vand.u32 2147483647, %v401
  %vm412 = vcmp.eq.f32.partialorder %v411, 8.507059e+37
  %v413 = vand.u32 %v401, 2147483648
  %v414 = vor.u32 1.1754944e-38, %v413
  %v415 = vsel %vm412, %v414, %v410
  %v416 = vmul.f32 1.0, %v415
  %v417 = vtanh.pop %v397
  %v418 = vmul.f32 %v416, %v280
  %420 = vrot.lane.b32.xlu0 %v417, 32
  %v421 = vpop.permute.xlu0 %420
  %v423 = vmul.f32 %v416, %v421
  %425 = vrot.lane.b32.xlu0 %v423, 32
  %v426 = vpop.permute.xlu0 %425
  %v428 = vadd.f32 %v418, %v426
  %v429 = vtanh.pop %v428
  %431 = vrot.lane.b32.xlu0 %v429, 32
  %v432 = vpop.permute.xlu0 %431
  %v434 = vmul.f32 %v416, %v432
  %s435 = scalar_lea.vmem [#allocation2], 16
  %v436 = vld [vmem:[%s435] sm:$0xff]
  %437 = vmatpush.msra.mxu0 0.0
  %438 = vmatpush.msra.mxu0 0.0
  %439 = vmatpush.msra.mxu0 0.0
  %440 = vmatpush.msra.mxu0 0.0
  %441 = vmatpush.msra.mxu0 0.0
  %442 = vmatpush.msra.mxu0 0.0
  %443 = vmatpush.msra.mxu0 0.0
  %444 = vmatpush.msra.mxu0 0.0
  %445 = vmatpush.msra.mxu0 0.0
  %446 = vmatpush.msra.mxu0 0.0
  %447 = vmatpush.msra.mxu0 0.0
  %448 = vmatpush.msra.mxu0 0.0
  %449 = vmatpush.msra.mxu0 %v133
  %450 = vmatpush.msra.mxu0 %v132
  %451 = vmatpush.msra.mxu0 %v131
  %452 = vmatpush.msra.mxu0 %v130
  %453 = vmatmul.f32.gmra.mxu0 %v375
  %v454 = vpop.f32.mrf.mxu0
  %v455 = vadd.f32 0.0, %v454
  %456 = vdwg.mxu0
  %v457 = vadd.f32 %v436, %v455
  %v458 = vxor.u32 %v457, 2147483648
  %v459 = vmul.f32 %v458, 1.442695
  %v460 = vpow.pop %v459
  %v461 = vadd.f32 %v460, 1.0
  %v462 = vrcp.pop %v461
  %v463 = vmul.f32 %v461, %v462
  %v464 = vsub.f32 1.0, %v463
  %v465 = vmul.f32 %v462, %v464
  %v466 = vadd.f32 %v462, %v465
  %vm467 = vweird.f32 %v461
  %vm468 = vweird.f32 %v462
  %vm469 = vmor %vm467, %vm468
  %v470 = vsel %vm469, %v462, %v466
  %v471 = vand.u32 2147483647, %v461
  %vm472 = vcmp.eq.f32.partialorder %v471, 8.507059e+37
  %v473 = vand.u32 %v461, 2147483648
  %v474 = vor.u32 1.1754944e-38, %v473
  %v475 = vsel %vm472, %v474, %v470
  %v476 = vmul.f32 1.0, %v475
  %v477 = vtanh.pop %v457
  %v478 = vmul.f32 %v476, %v340
  %480 = vrot.lane.b32.xlu0 %v477, 32
  %v481 = vpop.permute.xlu0 %480
  %v483 = vmul.f32 %v476, %v481
  %485 = vrot.lane.b32.xlu0 %v483, 32
  %v486 = vpop.permute.xlu0 %485
  %v488 = vadd.f32 %v478, %v486
  %v489 = vtanh.pop %v488
  %491 = vrot.lane.b32.xlu0 %v489, 32
  %v492 = vpop.permute.xlu0 %491
  %v494 = vmul.f32 %v476, %v492
  %496 = vrot.lane.b32.xlu0 %v434, 64
  %v497 = vpop.permute.xlu0 %496
  %v498 = vsel %vm134, %v497, 0
  %500 = vmatpush.msra.mxu0 0.0
  %501 = vmatpush.msra.mxu0 0.0
  %502 = vmatpush.msra.mxu0 0.0
  %503 = vmatpush.msra.mxu0 0.0
  %504 = vmatpush.msra.mxu0 0.0
  %505 = vmatpush.msra.mxu0 0.0
  %506 = vmatpush.msra.mxu0 0.0
  %507 = vmatpush.msra.mxu0 0.0
  %508 = vmatpush.msra.mxu0 0.0
  %509 = vmatpush.msra.mxu0 0.0
  %510 = vmatpush.msra.mxu0 0.0
  %511 = vmatpush.msra.mxu0 0.0
  %512 = vmatpush.msra.mxu0 %v203
  %513 = vmatpush.msra.mxu0 %v202
  %514 = vmatpush.msra.mxu0 %v201
  %515 = vmatpush.msra.mxu0 %v200
  %516 = vmatmul.f32.gmra.mxu0 %v498
  %v517 = vpop.f32.mrf.mxu0
  %v518 = vadd.f32 0.0, %v517
  %519 = vdwg.mxu0
  %521 = vrot.lane.b32.xlu0 %v494, 64
  %v522 = vpop.permute.xlu0 %521
  %v523 = vsel %vm134, %v522, 0
  %525 = vmatpush.msra.mxu0 0.0
  %526 = vmatpush.msra.mxu0 0.0
  %527 = vmatpush.msra.mxu0 0.0
  %528 = vmatpush.msra.mxu0 0.0
  %529 = vmatpush.msra.mxu0 0.0
  %530 = vmatpush.msra.mxu0 0.0
  %531 = vmatpush.msra.mxu0 0.0
  %532 = vmatpush.msra.mxu0 0.0
  %533 = vmatpush.msra.mxu0 0.0
  %534 = vmatpush.msra.mxu0 0.0
  %535 = vmatpush.msra.mxu0 0.0
  %536 = vmatpush.msra.mxu0 0.0
  %537 = vmatpush.msra.mxu0 %v199
  %538 = vmatpush.msra.mxu0 %v198
  %539 = vmatpush.msra.mxu0 %v197
  %540 = vmatpush.msra.mxu0 %v196
  %541 = vmatmul.f32.gmra.mxu0 %v523
  %v542 = vpop.f32.mrf.mxu0
  %v543 = vadd.f32 %v518, %v542
  %544 = vdwg.mxu0
  %v545 = vadd.f32 %v543, %v127
  %v546 = vxor.u32 %v545, 2147483648
  %v547 = vmul.f32 %v546, 1.442695
  %v548 = vpow.pop %v547
  %v549 = vadd.f32 %v548, 1.0
  %v550 = vrcp.pop %v549
  %v551 = vmul.f32 %v549, %v550
  %v552 = vsub.f32 1.0, %v551
  %v553 = vmul.f32 %v550, %v552
  %v554 = vadd.f32 %v550, %v553
  %vm555 = vweird.f32 %v549
  %vm556 = vweird.f32 %v550
  %vm557 = vmor %vm555, %vm556
  %v558 = vsel %vm557, %v550, %v554
  %v559 = vand.u32 2147483647, %v549
  %vm560 = vcmp.eq.f32.partialorder %v559, 8.507059e+37
  %v561 = vand.u32 %v549, 2147483648
  %v562 = vor.u32 1.1754944e-38, %v561
  %v563 = vsel %vm560, %v562, %v558
  %v564 = vmul.f32 1.0, %v563
  %v565 = vtanh.pop %v545
  %v566 = vmul.f32 %v564, %v428
  %568 = vrot.lane.b32.xlu0 %v565, 32
  %v569 = vpop.permute.xlu0 %568
  %v571 = vmul.f32 %v564, %v569
  %573 = vrot.lane.b32.xlu0 %v571, 32
  %v574 = vpop.permute.xlu0 %573
  %v576 = vadd.f32 %v566, %v574
  %v577 = vtanh.pop %v576
  %579 = vrot.lane.b32.xlu0 %v577, 32
  %v580 = vpop.permute.xlu0 %579
  %v582 = vmul.f32 %v564, %v580
  %s583 = scalar_lea.vmem [#allocation2], 24
  %v584 = vld [vmem:[%s583] sm:$0xff]
  %585 = vmatpush.msra.mxu0 0.0
  %586 = vmatpush.msra.mxu0 0.0
  %587 = vmatpush.msra.mxu0 0.0
  %588 = vmatpush.msra.mxu0 0.0
  %589 = vmatpush.msra.mxu0 0.0
  %590 = vmatpush.msra.mxu0 0.0
  %591 = vmatpush.msra.mxu0 0.0
  %592 = vmatpush.msra.mxu0 0.0
  %593 = vmatpush.msra.mxu0 0.0
  %594 = vmatpush.msra.mxu0 0.0
  %595 = vmatpush.msra.mxu0 0.0
  %596 = vmatpush.msra.mxu0 0.0
  %597 = vmatpush.msra.mxu0 %v133
  %598 = vmatpush.msra.mxu0 %v132
  %599 = vmatpush.msra.mxu0 %v131
  %600 = vmatpush.msra.mxu0 %v130
  %601 = vmatmul.f32.gmra.mxu0 %v523
  %v602 = vpop.f32.mrf.mxu0
  %v603 = vadd.f32 0.0, %v602
  %604 = vdwg.mxu0
  %v605 = vadd.f32 %v584, %v603
  %v606 = vxor.u32 %v605, 2147483648
  %v607 = vmul.f32 %v606, 1.442695
  %v608 = vpow.pop %v607
  %v609 = vadd.f32 %v608, 1.0
  %v610 = vrcp.pop %v609
  %v611 = vmul.f32 %v609, %v610
  %v612 = vsub.f32 1.0, %v611
  %v613 = vmul.f32 %v610, %v612
  %v614 = vadd.f32 %v610, %v613
  %vm615 = vweird.f32 %v609
  %vm616 = vweird.f32 %v610
  %vm617 = vmor %vm615, %vm616
  %v618 = vsel %vm617, %v610, %v614
  %v619 = vand.u32 2147483647, %v609
  %vm620 = vcmp.eq.f32.partialorder %v619, 8.507059e+37
  %v621 = vand.u32 %v609, 2147483648
  %v622 = vor.u32 1.1754944e-38, %v621
  %v623 = vsel %vm620, %v622, %v618
  %v624 = vmul.f32 1.0, %v623
  %v625 = vtanh.pop %v605
  %v626 = vmul.f32 %v624, %v488
  %628 = vrot.lane.b32.xlu0 %v625, 32
  %v629 = vpop.permute.xlu0 %628
  %v631 = vmul.f32 %v624, %v629
  %633 = vrot.lane.b32.xlu0 %v631, 32
  %v634 = vpop.permute.xlu0 %633
  %v636 = vadd.f32 %v626, %v634
  %v637 = vtanh.pop %v636
  %639 = vrot.lane.b32.xlu0 %v637, 32
  %v640 = vpop.permute.xlu0 %639
  %v642 = vmul.f32 %v624, %v640
  %644 = vrot.lane.b32.xlu0 %v582, 64
  %v645 = vpop.permute.xlu0 %644
  %v646 = vsel %vm134, %v645, 0
  %648 = vmatpush.msra.mxu0 0.0
  %649 = vmatpush.msra.mxu0 0.0
  %650 = vmatpush.msra.mxu0 0.0
  %651 = vmatpush.msra.mxu0 0.0
  %652 = vmatpush.msra.mxu0 0.0
  %653 = vmatpush.msra.mxu0 0.0
  %654 = vmatpush.msra.mxu0 0.0
  %655 = vmatpush.msra.mxu0 0.0
  %656 = vmatpush.msra.mxu0 0.0
  %657 = vmatpush.msra.mxu0 0.0
  %658 = vmatpush.msra.mxu0 0.0
  %659 = vmatpush.msra.mxu0 0.0
  %660 = vmatpush.msra.mxu0 %v203
  %661 = vmatpush.msra.mxu0 %v202
  %662 = vmatpush.msra.mxu0 %v201
  %663 = vmatpush.msra.mxu0 %v200
  %664 = vmatmul.f32.gmra.mxu0 %v646
  %v665 = vpop.f32.mrf.mxu0
  %v666 = vadd.f32 0.0, %v665
  %667 = vdwg.mxu0
  %669 = vrot.lane.b32.xlu0 %v642, 64
  %v670 = vpop.permute.xlu0 %669
  %v671 = vsel %vm134, %v670, 0
  %673 = vmatpush.msra.mxu0 0.0
  %674 = vmatpush.msra.mxu0 0.0
  %675 = vmatpush.msra.mxu0 0.0
  %676 = vmatpush.msra.mxu0 0.0
  %677 = vmatpush.msra.mxu0 0.0
  %678 = vmatpush.msra.mxu0 0.0
  %679 = vmatpush.msra.mxu0 0.0
  %680 = vmatpush.msra.mxu0 0.0
  %681 = vmatpush.msra.mxu0 0.0
  %682 = vmatpush.msra.mxu0 0.0
  %683 = vmatpush.msra.mxu0 0.0
  %684 = vmatpush.msra.mxu0 0.0
  %685 = vmatpush.msra.mxu0 %v199
  %686 = vmatpush.msra.mxu0 %v198
  %687 = vmatpush.msra.mxu0 %v197
  %688 = vmatpush.msra.mxu0 %v196
  %689 = vmatmul.f32.gmra.mxu0 %v671
  %v690 = vpop.f32.mrf.mxu0
  %v691 = vadd.f32 %v666, %v690
  %692 = vdwg.mxu0
  %v693 = vadd.f32 %v691, %v127
  %v694 = vxor.u32 %v693, 2147483648
  %v695 = vmul.f32 %v694, 1.442695
  %v696 = vpow.pop %v695
  %v697 = vadd.f32 %v696, 1.0
  %v698 = vrcp.pop %v697
  %v699 = vmul.f32 %v697, %v698
  %v700 = vsub.f32 1.0, %v699
  %v701 = vmul.f32 %v698, %v700
  %v702 = vadd.f32 %v698, %v701
  %vm703 = vweird.f32 %v697
  %vm704 = vweird.f32 %v698
  %vm705 = vmor %vm703, %vm704
  %v706 = vsel %vm705, %v698, %v702
  %v707 = vand.u32 2147483647, %v697
  %vm708 = vcmp.eq.f32.partialorder %v707, 8.507059e+37
  %v709 = vand.u32 %v697, 2147483648
  %v710 = vor.u32 1.1754944e-38, %v709
  %v711 = vsel %vm708, %v710, %v706
  %v712 = vmul.f32 1.0, %v711
  %v713 = vtanh.pop %v693
  %v714 = vmul.f32 %v712, %v576
  %716 = vrot.lane.b32.xlu0 %v713, 32
  %v717 = vpop.permute.xlu0 %716
  %v719 = vmul.f32 %v712, %v717
  %721 = vrot.lane.b32.xlu0 %v719, 32
  %v722 = vpop.permute.xlu0 %721
  %v724 = vadd.f32 %v714, %v722
  %v725 = vtanh.pop %v724
  %727 = vrot.lane.b32.xlu0 %v725, 32
  %v728 = vpop.permute.xlu0 %727
  %v730 = vmul.f32 %v712, %v728
  %s731 = scalar_lea.vmem [#allocation2], 32
  %v732 = vld [vmem:[%s731] sm:$0xff]
  %733 = vmatpush.msra.mxu0 0.0
  %734 = vmatpush.msra.mxu0 0.0
  %735 = vmatpush.msra.mxu0 0.0
  %736 = vmatpush.msra.mxu0 0.0
  %737 = vmatpush.msra.mxu0 0.0
  %738 = vmatpush.msra.mxu0 0.0
  %739 = vmatpush.msra.mxu0 0.0
  %740 = vmatpush.msra.mxu0 0.0
  %741 = vmatpush.msra.mxu0 0.0
  %742 = vmatpush.msra.mxu0 0.0
  %743 = vmatpush.msra.mxu0 0.0
  %744 = vmatpush.msra.mxu0 0.0
  %745 = vmatpush.msra.mxu0 %v133
  %746 = vmatpush.msra.mxu0 %v132
  %747 = vmatpush.msra.mxu0 %v131
  %748 = vmatpush.msra.mxu0 %v130
  %749 = vmatmul.f32.gmra.mxu0 %v671
  %v750 = vpop.f32.mrf.mxu0
  %v751 = vadd.f32 0.0, %v750
  %752 = vdwg.mxu0
  %v753 = vadd.f32 %v732, %v751
  %v754 = vxor.u32 %v753, 2147483648
  %v755 = vmul.f32 %v754, 1.442695
  %v756 = vpow.pop %v755
  %v757 = vadd.f32 %v756, 1.0
  %v758 = vrcp.pop %v757
  %v759 = vmul.f32 %v757, %v758
  %v760 = vsub.f32 1.0, %v759
  %v761 = vmul.f32 %v758, %v760
  %v762 = vadd.f32 %v758, %v761
  %vm763 = vweird.f32 %v757
  %vm764 = vweird.f32 %v758
  %vm765 = vmor %vm763, %vm764
  %v766 = vsel %vm765, %v758, %v762
  %v767 = vand.u32 2147483647, %v757
  %vm768 = vcmp.eq.f32.partialorder %v767, 8.507059e+37
  %v769 = vand.u32 %v757, 2147483648
  %v770 = vor.u32 1.1754944e-38, %v769
  %v771 = vsel %vm768, %v770, %v766
  %v772 = vmul.f32 1.0, %v771
  %v773 = vtanh.pop %v753
  %v774 = vmul.f32 %v772, %v636
  %776 = vrot.lane.b32.xlu0 %v773, 32
  %v777 = vpop.permute.xlu0 %776
  %v779 = vmul.f32 %v772, %v777
  %781 = vrot.lane.b32.xlu0 %v779, 32
  %v782 = vpop.permute.xlu0 %781
  %v784 = vadd.f32 %v774, %v782
  %v785 = vtanh.pop %v784
  %787 = vrot.lane.b32.xlu0 %v785, 32
  %v788 = vpop.permute.xlu0 %787
  %v790 = vmul.f32 %v772, %v788
  %792 = vrot.lane.b32.xlu0 %v730, 64
  %v793 = vpop.permute.xlu0 %792
  %v794 = vsel %vm134, %v793, 0
  %796 = vmatpush.msra.mxu0 0.0
  %797 = vmatpush.msra.mxu0 0.0
  %798 = vmatpush.msra.mxu0 0.0
  %799 = vmatpush.msra.mxu0 0.0
  %800 = vmatpush.msra.mxu0 0.0
  %801 = vmatpush.msra.mxu0 0.0
  %802 = vmatpush.msra.mxu0 0.0
  %803 = vmatpush.msra.mxu0 0.0
  %804 = vmatpush.msra.mxu0 0.0
  %805 = vmatpush.msra.mxu0 0.0
  %806 = vmatpush.msra.mxu0 0.0
  %807 = vmatpush.msra.mxu0 0.0
  %808 = vmatpush.msra.mxu0 %v203
  %809 = vmatpush.msra.mxu0 %v202
  %810 = vmatpush.msra.mxu0 %v201
  %811 = vmatpush.msra.mxu0 %v200
  %812 = vmatmul.f32.gmra.mxu0 %v794
  %v813 = vpop.f32.mrf.mxu0
  %v814 = vadd.f32 0.0, %v813
  %815 = vdwg.mxu0
  %817 = vrot.lane.b32.xlu0 %v790, 64
  %v818 = vpop.permute.xlu0 %817
  %v819 = vsel %vm134, %v818, 0
  %821 = vmatpush.msra.mxu0 0.0
  %822 = vmatpush.msra.mxu0 0.0
  %823 = vmatpush.msra.mxu0 0.0
  %824 = vmatpush.msra.mxu0 0.0
  %825 = vmatpush.msra.mxu0 0.0
  %826 = vmatpush.msra.mxu0 0.0
  %827 = vmatpush.msra.mxu0 0.0
  %828 = vmatpush.msra.mxu0 0.0
  %829 = vmatpush.msra.mxu0 0.0
  %830 = vmatpush.msra.mxu0 0.0
  %831 = vmatpush.msra.mxu0 0.0
  %832 = vmatpush.msra.mxu0 0.0
  %833 = vmatpush.msra.mxu0 %v199
  %834 = vmatpush.msra.mxu0 %v198
  %835 = vmatpush.msra.mxu0 %v197
  %836 = vmatpush.msra.mxu0 %v196
  %837 = vmatmul.f32.gmra.mxu0 %v819
  %v838 = vpop.f32.mrf.mxu0
  %v839 = vadd.f32 %v814, %v838
  %840 = vdwg.mxu0
  %v841 = vadd.f32 %v839, %v127
  %v842 = vxor.u32 %v841, 2147483648
  %v843 = vmul.f32 %v842, 1.442695
  %v844 = vpow.pop %v843
  %v845 = vadd.f32 %v844, 1.0
  %v846 = vrcp.pop %v845
  %v847 = vmul.f32 %v845, %v846
  %v848 = vsub.f32 1.0, %v847
  %v849 = vmul.f32 %v846, %v848
  %v850 = vadd.f32 %v846, %v849
  %vm851 = vweird.f32 %v845
  %vm852 = vweird.f32 %v846
  %vm853 = vmor %vm851, %vm852
  %v854 = vsel %vm853, %v846, %v850
  %v855 = vand.u32 2147483647, %v845
  %vm856 = vcmp.eq.f32.partialorder %v855, 8.507059e+37
  %v857 = vand.u32 %v845, 2147483648
  %v858 = vor.u32 1.1754944e-38, %v857
  %v859 = vsel %vm856, %v858, %v854
  %v860 = vmul.f32 1.0, %v859
  %v861 = vtanh.pop %v841
  %v862 = vmul.f32 %v860, %v724
  %864 = vrot.lane.b32.xlu0 %v861, 32
  %v865 = vpop.permute.xlu0 %864
  %v867 = vmul.f32 %v860, %v865
  %869 = vrot.lane.b32.xlu0 %v867, 32
  %v870 = vpop.permute.xlu0 %869
  %v872 = vadd.f32 %v862, %v870
  %v873 = vtanh.pop %v872
  %875 = vrot.lane.b32.xlu0 %v873, 32
  %v876 = vpop.permute.xlu0 %875
  %v878 = vmul.f32 %v860, %v876
  %s879 = scalar_lea.vmem [#allocation2], 40
  %v880 = vld [vmem:[%s879] sm:$0xff]
  %881 = vmatpush.msra.mxu0 0.0
  %882 = vmatpush.msra.mxu0 0.0
  %883 = vmatpush.msra.mxu0 0.0
  %884 = vmatpush.msra.mxu0 0.0
  %885 = vmatpush.msra.mxu0 0.0
  %886 = vmatpush.msra.mxu0 0.0
  %887 = vmatpush.msra.mxu0 0.0
  %888 = vmatpush.msra.mxu0 0.0
  %889 = vmatpush.msra.mxu0 0.0
  %890 = vmatpush.msra.mxu0 0.0
  %891 = vmatpush.msra.mxu0 0.0
  %892 = vmatpush.msra.mxu0 0.0
  %893 = vmatpush.msra.mxu0 %v133
  %894 = vmatpush.msra.mxu0 %v132
  %895 = vmatpush.msra.mxu0 %v131
  %896 = vmatpush.msra.mxu0 %v130
  %897 = vmatmul.f32.gmra.mxu0 %v819
  %v898 = vpop.f32.mrf.mxu0
  %v899 = vadd.f32 0.0, %v898
  %900 = vdwg.mxu0
  %v901 = vadd.f32 %v880, %v899
  %v902 = vxor.u32 %v901, 2147483648
  %v903 = vmul.f32 %v902, 1.442695
  %v904 = vpow.pop %v903
  %v905 = vadd.f32 %v904, 1.0
  %v906 = vrcp.pop %v905
  %v907 = vmul.f32 %v905, %v906
  %v908 = vsub.f32 1.0, %v907
  %v909 = vmul.f32 %v906, %v908
  %v910 = vadd.f32 %v906, %v909
  %vm911 = vweird.f32 %v905
  %vm912 = vweird.f32 %v906
  %vm913 = vmor %vm911, %vm912
  %v914 = vsel %vm913, %v906, %v910
  %v915 = vand.u32 2147483647, %v905
  %vm916 = vcmp.eq.f32.partialorder %v915, 8.507059e+37
  %v917 = vand.u32 %v905, 2147483648
  %v918 = vor.u32 1.1754944e-38, %v917
  %v919 = vsel %vm916, %v918, %v914
  %v920 = vmul.f32 1.0, %v919
  %v921 = vtanh.pop %v901
  %v922 = vmul.f32 %v920, %v784
  %924 = vrot.lane.b32.xlu0 %v921, 32
  %v925 = vpop.permute.xlu0 %924
  %v927 = vmul.f32 %v920, %v925
  %929 = vrot.lane.b32.xlu0 %v927, 32
  %v930 = vpop.permute.xlu0 %929
  %v932 = vadd.f32 %v922, %v930
  %v933 = vtanh.pop %v932
  %935 = vrot.lane.b32.xlu0 %v933, 32
  %v936 = vpop.permute.xlu0 %935
  %v938 = vmul.f32 %v920, %v936
  %940 = vrot.lane.b32.xlu0 %v878, 64
  %v941 = vpop.permute.xlu0 %940
  %v942 = vsel %vm134, %v941, 0
  %944 = vmatpush.msra.mxu0 0.0
  %945 = vmatpush.msra.mxu0 0.0
  %946 = vmatpush.msra.mxu0 0.0
  %947 = vmatpush.msra.mxu0 0.0
  %948 = vmatpush.msra.mxu0 0.0
  %949 = vmatpush.msra.mxu0 0.0
  %950 = vmatpush.msra.mxu0 0.0
  %951 = vmatpush.msra.mxu0 0.0
  %952 = vmatpush.msra.mxu0 0.0
  %953 = vmatpush.msra.mxu0 0.0
  %954 = vmatpush.msra.mxu0 0.0
  %955 = vmatpush.msra.mxu0 0.0
  %956 = vmatpush.msra.mxu0 %v203
  %957 = vmatpush.msra.mxu0 %v202
  %958 = vmatpush.msra.mxu0 %v201
  %959 = vmatpush.msra.mxu0 %v200
  %960 = vmatmul.f32.gmra.mxu0 %v942
  %v961 = vpop.f32.mrf.mxu0
  %v962 = vadd.f32 0.0, %v961
  %963 = vdwg.mxu0
  %965 = vrot.lane.b32.xlu0 %v938, 64
  %v966 = vpop.permute.xlu0 %965
  %v967 = vsel %vm134, %v966, 0
  %969 = vmatpush.msra.mxu0 0.0
  %970 = vmatpush.msra.mxu0 0.0
  %971 = vmatpush.msra.mxu0 0.0
  %972 = vmatpush.msra.mxu0 0.0
  %973 = vmatpush.msra.mxu0 0.0
  %974 = vmatpush.msra.mxu0 0.0
  %975 = vmatpush.msra.mxu0 0.0
  %976 = vmatpush.msra.mxu0 0.0
  %977 = vmatpush.msra.mxu0 0.0
  %978 = vmatpush.msra.mxu0 0.0
  %979 = vmatpush.msra.mxu0 0.0
  %980 = vmatpush.msra.mxu0 0.0
  %981 = vmatpush.msra.mxu0 %v199
  %982 = vmatpush.msra.mxu0 %v198
  %983 = vmatpush.msra.mxu0 %v197
  %984 = vmatpush.msra.mxu0 %v196
  %985 = vmatmul.f32.gmra.mxu0 %v967
  %v986 = vpop.f32.mrf.mxu0
  %v987 = vadd.f32 %v962, %v986
  %988 = vdwg.mxu0
  %v989 = vadd.f32 %v987, %v127
  %v990 = vxor.u32 %v989, 2147483648
  %v991 = vmul.f32 %v990, 1.442695
  %v992 = vpow.pop %v991
  %v993 = vadd.f32 %v992, 1.0
  %v994 = vrcp.pop %v993
  %v995 = vmul.f32 %v993, %v994
  %v996 = vsub.f32 1.0, %v995
  %v997 = vmul.f32 %v994, %v996
  %v998 = vadd.f32 %v994, %v997
  %vm999 = vweird.f32 %v993
  %vm1000 = vweird.f32 %v994
  %vm1001 = vmor %vm999, %vm1000
  %v1002 = vsel %vm1001, %v994, %v998
  %v1003 = vand.u32 2147483647, %v993
  %vm1004 = vcmp.eq.f32.partialorder %v1003, 8.507059e+37
  %v1005 = vand.u32 %v993, 2147483648
  %v1006 = vor.u32 1.1754944e-38, %v1005
  %v1007 = vsel %vm1004, %v1006, %v1002
  %v1008 = vmul.f32 1.0, %v1007
  %v1009 = vtanh.pop %v989
  %v1010 = vmul.f32 %v1008, %v872
  %1012 = vrot.lane.b32.xlu0 %v1009, 32
  %v1013 = vpop.permute.xlu0 %1012
  %v1015 = vmul.f32 %v1008, %v1013
  %1017 = vrot.lane.b32.xlu0 %v1015, 32
  %v1018 = vpop.permute.xlu0 %1017
  %v1020 = vadd.f32 %v1010, %v1018
  %v1021 = vtanh.pop %v1020
  %1023 = vrot.lane.b32.xlu0 %v1021, 32
  %v1024 = vpop.permute.xlu0 %1023
  %v1026 = vmul.f32 %v1008, %v1024
  %s1027 = scalar_lea.vmem [#allocation2], 48
  %v1028 = vld [vmem:[%s1027] sm:$0xff]
  %1029 = vmatpush.msra.mxu0 0.0
  %1030 = vmatpush.msra.mxu0 0.0
  %1031 = vmatpush.msra.mxu0 0.0
  %1032 = vmatpush.msra.mxu0 0.0
  %1033 = vmatpush.msra.mxu0 0.0
  %1034 = vmatpush.msra.mxu0 0.0
  %1035 = vmatpush.msra.mxu0 0.0
  %1036 = vmatpush.msra.mxu0 0.0
  %1037 = vmatpush.msra.mxu0 0.0
  %1038 = vmatpush.msra.mxu0 0.0
  %1039 = vmatpush.msra.mxu0 0.0
  %1040 = vmatpush.msra.mxu0 0.0
  %1041 = vmatpush.msra.mxu0 %v133
  %1042 = vmatpush.msra.mxu0 %v132
  %1043 = vmatpush.msra.mxu0 %v131
  %1044 = vmatpush.msra.mxu0 %v130
  %1045 = vmatmul.f32.gmra.mxu0 %v967
  %v1046 = vpop.f32.mrf.mxu0
  %v1047 = vadd.f32 0.0, %v1046
  %1048 = vdwg.mxu0
  %v1049 = vadd.f32 %v1028, %v1047
  %v1050 = vxor.u32 %v1049, 2147483648
  %v1051 = vmul.f32 %v1050, 1.442695
  %v1052 = vpow.pop %v1051
  %v1053 = vadd.f32 %v1052, 1.0
  %v1054 = vrcp.pop %v1053
  %v1055 = vmul.f32 %v1053, %v1054
  %v1056 = vsub.f32 1.0, %v1055
  %v1057 = vmul.f32 %v1054, %v1056
  %v1058 = vadd.f32 %v1054, %v1057
  %vm1059 = vweird.f32 %v1053
  %vm1060 = vweird.f32 %v1054
  %vm1061 = vmor %vm1059, %vm1060
  %v1062 = vsel %vm1061, %v1054, %v1058
  %v1063 = vand.u32 2147483647, %v1053
  %vm1064 = vcmp.eq.f32.partialorder %v1063, 8.507059e+37
  %v1065 = vand.u32 %v1053, 2147483648
  %v1066 = vor.u32 1.1754944e-38, %v1065
  %v1067 = vsel %vm1064, %v1066, %v1062
  %v1068 = vmul.f32 1.0, %v1067
  %v1069 = vtanh.pop %v1049
  %v1070 = vmul.f32 %v1068, %v932
  %1072 = vrot.lane.b32.xlu0 %v1069, 32
  %v1073 = vpop.permute.xlu0 %1072
  %v1075 = vmul.f32 %v1068, %v1073
  %1077 = vrot.lane.b32.xlu0 %v1075, 32
  %v1078 = vpop.permute.xlu0 %1077
  %v1080 = vadd.f32 %v1070, %v1078
  %v1081 = vtanh.pop %v1080
  %1083 = vrot.lane.b32.xlu0 %v1081, 32
  %v1084 = vpop.permute.xlu0 %1083
  %v1086 = vmul.f32 %v1068, %v1084
  %1088 = vrot.lane.b32.xlu0 %v1026, 64
  %v1089 = vpop.permute.xlu0 %1088
  %v1090 = vsel %vm134, %v1089, 0
  %1092 = vmatpush.msra.mxu0 0.0
  %1093 = vmatpush.msra.mxu0 0.0
  %1094 = vmatpush.msra.mxu0 0.0
  %1095 = vmatpush.msra.mxu0 0.0
  %1096 = vmatpush.msra.mxu0 0.0
  %1097 = vmatpush.msra.mxu0 0.0
  %1098 = vmatpush.msra.mxu0 0.0
  %1099 = vmatpush.msra.mxu0 0.0
  %1100 = vmatpush.msra.mxu0 0.0
  %1101 = vmatpush.msra.mxu0 0.0
  %1102 = vmatpush.msra.mxu0 0.0
  %1103 = vmatpush.msra.mxu0 0.0
  %1104 = vmatpush.msra.mxu0 %v203
  %1105 = vmatpush.msra.mxu0 %v202
  %1106 = vmatpush.msra.mxu0 %v201
  %1107 = vmatpush.msra.mxu0 %v200
  %1108 = vmatmul.f32.gmra.mxu0 %v1090
  %v1109 = vpop.f32.mrf.mxu0
  %v1110 = vadd.f32 0.0, %v1109
  %1111 = vdwg.mxu0
  %1113 = vrot.lane.b32.xlu0 %v1086, 64
  %v1114 = vpop.permute.xlu0 %1113
  %v1115 = vsel %vm134, %v1114, 0
  %1117 = vmatpush.msra.mxu0 0.0
  %1118 = vmatpush.msra.mxu0 0.0
  %1119 = vmatpush.msra.mxu0 0.0
  %1120 = vmatpush.msra.mxu0 0.0
  %1121 = vmatpush.msra.mxu0 0.0
  %1122 = vmatpush.msra.mxu0 0.0
  %1123 = vmatpush.msra.mxu0 0.0
  %1124 = vmatpush.msra.mxu0 0.0
  %1125 = vmatpush.msra.mxu0 0.0
  %1126 = vmatpush.msra.mxu0 0.0
  %1127 = vmatpush.msra.mxu0 0.0
  %1128 = vmatpush.msra.mxu0 0.0
  %1129 = vmatpush.msra.mxu0 %v199
  %1130 = vmatpush.msra.mxu0 %v198
  %1131 = vmatpush.msra.mxu0 %v197
  %1132 = vmatpush.msra.mxu0 %v196
  %1133 = vmatmul.f32.gmra.mxu0 %v1115
  %v1134 = vpop.f32.mrf.mxu0
  %v1135 = vadd.f32 %v1110, %v1134
  %1136 = vdwg.mxu0
  %v1137 = vadd.f32 %v1135, %v127
  %v1138 = vxor.u32 %v1137, 2147483648
  %v1139 = vmul.f32 %v1138, 1.442695
  %v1140 = vpow.pop %v1139
  %v1141 = vadd.f32 %v1140, 1.0
  %v1142 = vrcp.pop %v1141
  %v1143 = vmul.f32 %v1141, %v1142
  %v1144 = vsub.f32 1.0, %v1143
  %v1145 = vmul.f32 %v1142, %v1144
  %v1146 = vadd.f32 %v1142, %v1145
  %vm1147 = vweird.f32 %v1141
  %vm1148 = vweird.f32 %v1142
  %vm1149 = vmor %vm1147, %vm1148
  %v1150 = vsel %vm1149, %v1142, %v1146
  %v1151 = vand.u32 2147483647, %v1141
  %vm1152 = vcmp.eq.f32.partialorder %v1151, 8.507059e+37
  %v1153 = vand.u32 %v1141, 2147483648
  %v1154 = vor.u32 1.1754944e-38, %v1153
  %v1155 = vsel %vm1152, %v1154, %v1150
  %v1156 = vmul.f32 1.0, %v1155
  %v1157 = vtanh.pop %v1137
  %v1158 = vmul.f32 %v1156, %v1020
  %1160 = vrot.lane.b32.xlu0 %v1157, 32
  %v1161 = vpop.permute.xlu0 %1160
  %v1163 = vmul.f32 %v1156, %v1161
  %1165 = vrot.lane.b32.xlu0 %v1163, 32
  %v1166 = vpop.permute.xlu0 %1165
  %v1168 = vadd.f32 %v1158, %v1166
  %v1169 = vtanh.pop %v1168
  %1171 = vrot.lane.b32.xlu0 %v1169, 32
  %v1172 = vpop.permute.xlu0 %1171
  %v1174 = vmul.f32 %v1156, %v1172
  %s1175 = scalar_lea.vmem [#allocation2], 56
  %v1176 = vld [vmem:[%s1175] sm:$0xff]
  %1177 = vmatpush.msra.mxu0 0.0
  %1178 = vmatpush.msra.mxu0 0.0
  %1179 = vmatpush.msra.mxu0 0.0
  %1180 = vmatpush.msra.mxu0 0.0
  %1181 = vmatpush.msra.mxu0 0.0
  %1182 = vmatpush.msra.mxu0 0.0
  %1183 = vmatpush.msra.mxu0 0.0
  %1184 = vmatpush.msra.mxu0 0.0
  %1185 = vmatpush.msra.mxu0 0.0
  %1186 = vmatpush.msra.mxu0 0.0
  %1187 = vmatpush.msra.mxu0 0.0
  %1188 = vmatpush.msra.mxu0 0.0
  %1189 = vmatpush.msra.mxu0 %v133
  %1190 = vmatpush.msra.mxu0 %v132
  %1191 = vmatpush.msra.mxu0 %v131
  %1192 = vmatpush.msra.mxu0 %v130
  %1193 = vmatmul.f32.gmra.mxu0 %v1115
  %v1194 = vpop.f32.mrf.mxu0
  %v1195 = vadd.f32 0.0, %v1194
  %1196 = vdwg.mxu0
  %v1197 = vadd.f32 %v1176, %v1195
  %v1198 = vxor.u32 %v1197, 2147483648
  %v1199 = vmul.f32 %v1198, 1.442695
  %v1200 = vpow.pop %v1199
  %v1201 = vadd.f32 %v1200, 1.0
  %v1202 = vrcp.pop %v1201
  %v1203 = vmul.f32 %v1201, %v1202
  %v1204 = vsub.f32 1.0, %v1203
  %v1205 = vmul.f32 %v1202, %v1204
  %v1206 = vadd.f32 %v1202, %v1205
  %vm1207 = vweird.f32 %v1201
  %vm1208 = vweird.f32 %v1202
  %vm1209 = vmor %vm1207, %vm1208
  %v1210 = vsel %vm1209, %v1202, %v1206
  %v1211 = vand.u32 2147483647, %v1201
  %vm1212 = vcmp.eq.f32.partialorder %v1211, 8.507059e+37
  %v1213 = vand.u32 %v1201, 2147483648
  %v1214 = vor.u32 1.1754944e-38, %v1213
  %v1215 = vsel %vm1212, %v1214, %v1210
  %v1216 = vmul.f32 1.0, %v1215
  %v1217 = vtanh.pop %v1197
  %v1218 = vmul.f32 %v1216, %v1080
  %1220 = vrot.lane.b32.xlu0 %v1217, 32
  %v1221 = vpop.permute.xlu0 %1220
  %v1223 = vmul.f32 %v1216, %v1221
  %1225 = vrot.lane.b32.xlu0 %v1223, 32
  %v1226 = vpop.permute.xlu0 %1225
  %v1228 = vadd.f32 %v1218, %v1226
  %v1229 = vtanh.pop %v1228
  %1231 = vrot.lane.b32.xlu0 %v1229, 32
  %v1232 = vpop.permute.xlu0 %1231
  %v1234 = vmul.f32 %v1216, %v1232
  %1236 = vrot.lane.b32.xlu0 %v1174, 64
  %v1237 = vpop.permute.xlu0 %1236
  %v1238 = vsel %vm134, %v1237, 0
  %1240 = vmatpush.msra.mxu0 0.0
  %1241 = vmatpush.msra.mxu0 0.0
  %1242 = vmatpush.msra.mxu0 0.0
  %1243 = vmatpush.msra.mxu0 0.0
  %1244 = vmatpush.msra.mxu0 0.0
  %1245 = vmatpush.msra.mxu0 0.0
  %1246 = vmatpush.msra.mxu0 0.0
  %1247 = vmatpush.msra.mxu0 0.0
  %1248 = vmatpush.msra.mxu0 0.0
  %1249 = vmatpush.msra.mxu0 0.0
  %1250 = vmatpush.msra.mxu0 0.0
  %1251 = vmatpush.msra.mxu0 0.0
  %1252 = vmatpush.msra.mxu0 %v203
  %1253 = vmatpush.msra.mxu0 %v202
  %1254 = vmatpush.msra.mxu0 %v201
  %1255 = vmatpush.msra.mxu0 %v200
  %1256 = vmatmul.f32.gmra.mxu0 %v1238
  %v1257 = vpop.f32.mrf.mxu0
  %v1258 = vadd.f32 0.0, %v1257
  %1259 = vdwg.mxu0
  %1261 = vrot.lane.b32.xlu0 %v1234, 64
  %v1262 = vpop.permute.xlu0 %1261
  %v1263 = vsel %vm134, %v1262, 0
  %1265 = vmatpush.msra.mxu0 0.0
  %1266 = vmatpush.msra.mxu0 0.0
  %1267 = vmatpush.msra.mxu0 0.0
  %1268 = vmatpush.msra.mxu0 0.0
  %1269 = vmatpush.msra.mxu0 0.0
  %1270 = vmatpush.msra.mxu0 0.0
  %1271 = vmatpush.msra.mxu0 0.0
  %1272 = vmatpush.msra.mxu0 0.0
  %1273 = vmatpush.msra.mxu0 0.0
  %1274 = vmatpush.msra.mxu0 0.0
  %1275 = vmatpush.msra.mxu0 0.0
  %1276 = vmatpush.msra.mxu0 0.0
  %1277 = vmatpush.msra.mxu0 %v199
  %1278 = vmatpush.msra.mxu0 %v198
  %1279 = vmatpush.msra.mxu0 %v197
  %1280 = vmatpush.msra.mxu0 %v196
  %1281 = vmatmul.f32.gmra.mxu0 %v1263
  %v1282 = vpop.f32.mrf.mxu0
  %v1283 = vadd.f32 %v1258, %v1282
  %1284 = vdwg.mxu0
  %v1285 = vadd.f32 %v1283, %v127
  %v1286 = vxor.u32 %v1285, 2147483648
  %v1287 = vmul.f32 %v1286, 1.442695
  %v1288 = vpow.pop %v1287
  %v1289 = vadd.f32 %v1288, 1.0
  %v1290 = vrcp.pop %v1289
  %v1291 = vmul.f32 %v1289, %v1290
  %v1292 = vsub.f32 1.0, %v1291
  %v1293 = vmul.f32 %v1290, %v1292
  %v1294 = vadd.f32 %v1290, %v1293
  %vm1295 = vweird.f32 %v1289
  %vm1296 = vweird.f32 %v1290
  %vm1297 = vmor %vm1295, %vm1296
  %v1298 = vsel %vm1297, %v1290, %v1294
  %v1299 = vand.u32 2147483647, %v1289
  %vm1300 = vcmp.eq.f32.partialorder %v1299, 8.507059e+37
  %v1301 = vand.u32 %v1289, 2147483648
  %v1302 = vor.u32 1.1754944e-38, %v1301
  %v1303 = vsel %vm1300, %v1302, %v1298
  %v1304 = vmul.f32 1.0, %v1303
  %v1305 = vtanh.pop %v1285
  %v1306 = vmul.f32 %v1304, %v1168
  %1308 = vrot.lane.b32.xlu0 %v1305, 32
  %v1309 = vpop.permute.xlu0 %1308
  %v1311 = vmul.f32 %v1304, %v1309
  %1313 = vrot.lane.b32.xlu0 %v1311, 32
  %v1314 = vpop.permute.xlu0 %1313
  %v1316 = vadd.f32 %v1306, %v1314
  %v1317 = vtanh.pop %v1316
  %1319 = vrot.lane.b32.xlu0 %v1317, 32
  %v1320 = vpop.permute.xlu0 %1319
  %v1322 = vmul.f32 %v1304, %v1320
  %v1323 = vld [vmem:[%s7] sm:$0x1]
  %v1325 = vperm.slane %v1323, 0
  %1326 = vrot.lane.b32.xlu0 %v1325, 64
  %v1327 = vpop.permute.xlu0 %1326
  %v1329 = vmul.f32 %v1322, %v1327
  %1331 = vrot.lane.b32.xlu0 %v1329, 64
  %v1332 = vpop.permute.xlu0 %1331
  %v1334 = vsel %vm134, %v1332, 0.0
  %1335 = vadd.xlane.f32.xlu0 %v1334
  %v1336 = vpop.xlane.xlu0 %1335
  %v1337 = vld [vmem:[#allocation3] sm:$0x1]
  %v1339 = vperm.slane %v1337, 0
  %v1341 = vadd.f32 %v1336, %v1339
  %vm1342 = vcmask 7168
  %1343 = vst.msk [vmem:[%s9] sm:$0xff] %vm1342, %v1341
  // Predicated region
  $region38: #{lstm_forward.1} parent=0 // pred_check
    _
  $region39: #{lstm_forward.1} parent=0 // pred_check_branch
    %1345 = sbr.rel (0) target = $region41
  $region40: #{lstm_forward.1} parent=0 // pred_region
    _
  $region41: #{lstm_forward.1} parent=0 // pred_fallthru
    _
  // Predicated region
  $region42: #{lstm_forward.1} parent=0 // pred_check
    _
  $region43: #{lstm_forward.1} parent=0 // pred_check_branch
    %1347 = sbr.rel (0) target = $region45
  $region44: #{lstm_forward.1} parent=0 // pred_region
    _
  $region45: #{lstm_forward.1} parent=0 // pred_fallthru
    _

</llo_original>
